<compile_context>
chip_gen: v6e
topology: v6e:2x2x1
jax: 0.10.0
libtpu: 0.0.40
codegen_flags: <defaults>
</compile_context>

<pallas_src>
import math
from functools import partial

import jax
import jax.numpy as jnp
from jax.experimental import pallas as pl
from jax.experimental.pallas import tpu as pltpu

LANE = 128  # pad the tiny output_dim up to a lane-dense store width


# ----------------------------------------------------------------------------
# Fused forward kernel: one grid step = (batch block bb, encoder layer l).
# ----------------------------------------------------------------------------
def fused_forward_kernel(src_ref, pe_ref, in_w_ref, in_b_ref,
                         wqkv_ref, bqkv_ref, wo_ref,
                         w1_ref, b1_ref, w2_ref, vecs_ref,
                         out_w_ref, out_b_ref,
                         o_ref, x_scratch, *, nhead, batch_block, eps):
    layer = pl.program_id(1)
    num_layers = pl.num_programs(1)

    # ---- first layer step: input projection + positional encoding ----
    @pl.when(layer == 0)
    def _():
        bb, s, in_dim = src_ref.shape
        src = src_ref[...].reshape(bb * s, in_dim).astype(jnp.bfloat16)        # (M, In)
        x0 = jnp.dot(src, in_w_ref[...], preferred_element_type=jnp.float32)   # (M, D)
        x_scratch[...] = x0 + in_b_ref[...] + pe_ref[...]

    x = x_scratch[...]                                                         # (M, D) f32
    M, D = x.shape
    Bb = batch_block
    S = M // Bb
    H = nhead
    dh = D // H

    vecs = vecs_ref[0]                                                         # (6, D) f32
    bo, b2 = vecs[0:1], vecs[1:2]
    ln1g, ln1b = vecs[2:3], vecs[3:4]
    ln2g, ln2b = vecs[4:5], vecs[5:6]

    # ---- QKV: single full-width matmul (softmax scale pre-folded into q cols) ----
    x_bf = x.astype(jnp.bfloat16)
    qkv = jnp.dot(x_bf, wqkv_ref[0],
                  preferred_element_type=jnp.float32) + bqkv_ref[0]            # (M, 3D)

    # ---- per-head attention (batched over Bb sequences; contraction dh is inherent) ----
    ctx_heads = []
    for h in range(H):  # static unroll; H is small
        q_h = qkv[:, h * dh:(h + 1) * dh].reshape(Bb, S, dh).astype(jnp.bfloat16)
        k_h = qkv[:, D + h * dh:D + (h + 1) * dh].reshape(Bb, S, dh).astype(jnp.bfloat16)
        v_h = qkv[:, 2 * D + h * dh:2 * D + (h + 1) * dh].reshape(Bb, S, dh).astype(jnp.bfloat16)

        s_h = jnp.einsum("bqd,bkd->bqk", q_h, k_h,
                         preferred_element_type=jnp.float32)                   # (Bb, S, S)
        s_h = s_h - jnp.max(s_h, axis=-1, keepdims=True)
        p_h = jnp.exp(s_h)
        p_h = p_h * pl.reciprocal(jnp.sum(p_h, axis=-1, keepdims=True), approx=True)
        c_h = jnp.einsum("bqk,bkd->bqd", p_h.astype(jnp.bfloat16), v_h,
                         preferred_element_type=jnp.float32)                   # (Bb, S, dh)
        ctx_heads.append(c_h.reshape(M, dh))
    ctx = jnp.concatenate(ctx_heads, axis=-1).astype(jnp.bfloat16)             # (M, D)

    # ---- attention output projection: one full-width matmul ----
    attn = jnp.dot(ctx, wo_ref[0], preferred_element_type=jnp.float32) + bo    # (M, D)

    # ---- residual + LayerNorm 1 (dropout is identity in eval mode) ----
    h1 = x + attn
    mu1 = jnp.mean(h1, axis=-1, keepdims=True)
    var1 = jnp.mean((h1 - mu1) ** 2, axis=-1, keepdims=True)
    h1n = (h1 - mu1) * jax.lax.rsqrt(var1 + eps) * ln1g + ln1b

    # ---- feed-forward (ReLU) ----
    ff = jnp.dot(h1n.astype(jnp.bfloat16), w1_ref[0],
                 preferred_element_type=jnp.float32) + b1_ref[0]
    ff = jnp.maximum(ff, 0.0)
    ff = jnp.dot(ff.astype(jnp.bfloat16), w2_ref[0],
                 preferred_element_type=jnp.float32) + b2

    # ---- residual + LayerNorm 2 ----
    h2 = h1n + ff
    mu2 = jnp.mean(h2, axis=-1, keepdims=True)
    var2 = jnp.mean((h2 - mu2) ** 2, axis=-1, keepdims=True)
    x_new = (h2 - mu2) * jax.lax.rsqrt(var2 + eps) * ln2g + ln2b
    x_scratch[...] = x_new

    # ---- last layer step: output projection (lane-padded -> unmasked store) ----
    @pl.when(layer == num_layers - 1)
    def _():
        y = jnp.dot(x_new.astype(jnp.bfloat16), out_w_ref[...],
                    preferred_element_type=jnp.float32) + out_b_ref[...]       # (M, LANE)
        o_ref[...] = y.reshape(Bb, S, LANE)


# ----------------------------------------------------------------------------
# Wrapper: single pallas_call for the whole forward.
# ----------------------------------------------------------------------------
def _choose_batch_block(B, S, target_rows=256, max_rows=1024):
    """Largest divisor Bb of B with Bb*S <= max_rows, stopping once Bb*S >= target_rows."""
    best = 1
    for bb in range(1, B + 1):
        if B % bb == 0 and bb * S <= max_rows:
            best = bb
            if bb * S >= target_rows:
                break
    return best


def time_series_transformer_forward(params, src):
    # TODO(synk): src_mask is not supported (module's default src_mask=None path only).
    B, S, input_dim = src.shape
    D = params["d_model"]
    H = params["nhead"]
    F = params["dim_feedforward"]
    L = params["wqkv"].shape[0]
    assert D % H == 0, "d_model must be divisible by nhead"
    assert D % 2 == 0, "d_model must be even for positional encoding"

    Bb = _choose_batch_block(B, S)
    assert B % Bb == 0
    M = Bb * S

    pe = make_positional_encoding(S, D)
    pe_tiled = jnp.tile(pe, (Bb, 1))                                           # (M, D)

    kern = partial(fused_forward_kernel, nhead=H, batch_block=Bb, eps=1e-5)

    # Advisory cost estimate (flops: QKV + out-proj + FFN + attention + in/out proj).
    dh = D // H
    flops = int(2 * B * S * L * (3 * D * D + D * D + 2 * D * F)
                + 4 * B * L * H * S * S * dh
                + 2 * B * S * (input_dim * D + D * LANE))
    transcendentals = int(B * L * H * S * S)
    weight_bytes = int(2 * L * (3 * D * D + D * D + 2 * D * F))                # bf16 per-layer weights
    bytes_accessed = int((B // Bb) * weight_bytes
                         + src.size * 4 + B * S * LANE * 4
                         + 4 * L * (3 * D + 6 * D + F))

    out = pl.pallas_call(
        kern,
        out_shape=jax.ShapeDtypeStruct((B, S, LANE), jnp.float32),
        grid=(B // Bb, L),
        in_specs=[
            pl.BlockSpec((Bb, S, input_dim), lambda b, l: (b, 0, 0)),     # src
            pl.BlockSpec((M, D),             lambda b, l: (0, 0)),        # positional enc (tiled to Bb*S)
            pl.BlockSpec((input_dim, D),     lambda b, l: (0, 0)),        # in_w (bf16)
            pl.BlockSpec((1, D),             lambda b, l: (0, 0)),        # in_b
            pl.BlockSpec((1, D, 3 * D),      lambda b, l: (l, 0, 0)),     # wqkv (bf16, q cols pre-scaled)
            pl.BlockSpec((1, 1, 3 * D),      lambda b, l: (l, 0, 0)),     # bqkv (q part pre-scaled)
            pl.BlockSpec((1, D, D),          lambda b, l: (l, 0, 0)),     # wo (bf16)
            pl.BlockSpec((1, D, F),          lambda b, l: (l, 0, 0)),     # w1 (bf16)
            pl.BlockSpec((1, 1, F),          lambda b, l: (l, 0, 0)),     # b1
            pl.BlockSpec((1, F, D),          lambda b, l: (l, 0, 0)),     # w2 (bf16)
            pl.BlockSpec((1, 6, D),          lambda b, l: (l, 0, 0)),     # packed [bo,b2,ln1g,ln1b,ln2g,ln2b]
            pl.BlockSpec((D, LANE),          lambda b, l: (0, 0)),        # out_w (lane-padded, bf16)
            pl.BlockSpec((1, LANE),          lambda b, l: (0, 0)),        # out_b (lane-padded)
        ],
        out_specs=pl.BlockSpec((Bb, S, LANE), lambda b, l: (b, 0, 0)),
        scratch_shapes=[pltpu.VMEM((M, D), jnp.float32)],                 # activation carried over layers
        compiler_params=pltpu.CompilerParams(
            dimension_semantics=("parallel", "arbitrary")),
        # TODO(synk): when scaling D/F, raise vmem_limit_bytes (v6e) / re-budget for v7x's 64 MiB,
        # and tile attention over key blocks (online softmax) for large S.
        cost_estimate=pl.CostEstimate(flops=flops,
                                      transcendentals=transcendentals,
                                      bytes_accessed=bytes_accessed),
    )(src, pe_tiled, params["in_w"], params["in_b"],
      params["wqkv"], params["bqkv"], params["wo"],
      params["w1"], params["b1"], params["w2"], params["vecs"],
      params["out_w"], params["out_b"])

    return out[:, :, :params["output_dim"]]


# ----------------------------------------------------------------------------
# Positional encoding + parameter init (weights stored matmul-ready).
# ----------------------------------------------------------------------------
def make_positional_encoding(seq_len, d_model):
    position = jnp.arange(seq_len, dtype=jnp.float32)[:, None]
    div_term = jnp.exp(jnp.arange(0, d_model, 2, dtype=jnp.float32)
                       * (-math.log(10000.0) / d_model))
    pe = jnp.zeros((seq_len, d_model), dtype=jnp.float32)
    pe = pe.at[:, 0::2].set(jnp.sin(position * div_term))
    pe = pe.at[:, 1::2].set(jnp.cos(position * div_term))
    return pe


def init_params(key, input_dim, d_model, nhead, num_layers, dim_feedforward, output_dim):
    H, dh = nhead, d_model // nhead
    scale = 1.0 / math.sqrt(dh)
    keys = jax.random.split(key, 4 + 12 * num_layers)

    def rnd(k, shape, s=0.05):
        return jax.random.normal(k, shape, jnp.float32) * s

    in_w = rnd(keys[0], (input_dim, d_model))
    in_b = rnd(keys[1], (1, d_model))
    out_w = rnd(keys[2], (d_model, output_dim))
    out_b = rnd(keys[3], (1, output_dim))

    # lane-pad the (tiny) output projection so the kernel's final store is lane-dense
    out_w_pad = jnp.zeros((d_model, LANE), jnp.float32).at[:, :output_dim].set(out_w)
    out_b_pad = jnp.zeros((1, LANE), jnp.float32).at[:, :output_dim].set(out_b)

    stacks = dict(wqkv=[], bqkv=[], wo=[], w1=[], b1=[], w2=[], vecs=[])
    for i in range(num_layers):
        k = keys[4 + 12 * i: 4 + 12 * (i + 1)]
        wq, wk, wv = rnd(k[0], (d_model, d_model)), rnd(k[1], (d_model, d_model)), rnd(k[2], (d_model, d_model))
        bq, bk, bv = rnd(k[3], (d_model,)), rnd(k[4], (d_model,)), rnd(k[5], (d_model,))
        wo, bo = rnd(k[6], (d_model, d_model)), rnd(k[7], (d_model,))
        w1, b1 = rnd(k[8], (d_model, dim_feedforward)), rnd(k[9], (dim_feedforward,))
        w2, b2 = rnd(k[10], (dim_feedforward, d_model)), rnd(k[11], (d_model,))
        ln1g = jnp.ones((d_model,), jnp.float32); ln1b = jnp.zeros((d_model,), jnp.float32)
        ln2g = jnp.ones((d_model,), jnp.float32); ln2b = jnp.zeros((d_model,), jnp.float32)

        # full-width (D, 3D) QKV weight; fold softmax 1/sqrt(dh) into the q columns + q bias
        stacks["wqkv"].append(jnp.concatenate([wq * scale, wk, wv], axis=1))        # (D, 3D)
        stacks["bqkv"].append(jnp.concatenate([bq * scale, bk, bv], axis=0)[None])  # (1, 3D)
        stacks["wo"].append(wo)                                                     # (D, D)
        stacks["w1"].append(w1)
        stacks["b1"].append(b1[None, :])
        stacks["w2"].append(w2)
        stacks["vecs"].append(jnp.stack([bo, b2, ln1g, ln1b, ln2g, ln2b], axis=0))  # (6, D)

    return dict(
        in_w=in_w.astype(jnp.bfloat16), in_b=in_b,
        out_w=out_w_pad.astype(jnp.bfloat16), out_b=out_b_pad,
        wqkv=jnp.stack(stacks["wqkv"]).astype(jnp.bfloat16),
        bqkv=jnp.stack(stacks["bqkv"]),
        wo=jnp.stack(stacks["wo"]).astype(jnp.bfloat16),
        w1=jnp.stack(stacks["w1"]).astype(jnp.bfloat16),
        b1=jnp.stack(stacks["b1"]),
        w2=jnp.stack(stacks["w2"]).astype(jnp.bfloat16),
        vecs=jnp.stack(stacks["vecs"]),
        nhead=nhead, output_dim=output_dim,
        d_model=d_model, dim_feedforward=dim_feedforward,
    )


if __name__ == "__main__":
    # Small deterministic config: input_dim=4, d_model=32, nhead=4,
    # num_layers=2, dim_feedforward=64, output_dim=1, batch=2, seq=8.
    key = jax.random.PRNGKey(0)
    k_param, k_data = jax.random.split(key)
    params = init_params(k_param, input_dim=4, d_model=32, nhead=4,
                         num_layers=2, dim_feedforward=64, output_dim=1)
    src = jax.random.normal(k_data, (2, 8, 4), dtype=jnp.float32)

    out = time_series_transformer_forward(params, src)
    out = jax.block_until_ready(out)
    assert out.shape == (2, 8, 1), out.shape
    print("KERNEL_OK")
</pallas_src>

<mosaic_0001>
module attributes {stable_mosaic.version = 11 : i64} {
  func.func @fused_forward_kernel(%arg0: i32, %arg1: i32, %arg2: memref<2x8x4xf32, #tpu.memory_space<vmem>>, %arg3: memref<16x32xf32, #tpu.memory_space<vmem>>, %arg4: memref<4x32xbf16, #tpu.memory_space<vmem>>, %arg5: memref<1x32xf32, #tpu.memory_space<vmem>>, %arg6: memref<1x32x96xbf16, #tpu.memory_space<vmem>>, %arg7: memref<1x1x96xf32, #tpu.memory_space<vmem>>, %arg8: memref<1x32x32xbf16, #tpu.memory_space<vmem>>, %arg9: memref<1x32x64xbf16, #tpu.memory_space<vmem>>, %arg10: memref<1x1x64xf32, #tpu.memory_space<vmem>>, %arg11: memref<1x64x32xbf16, #tpu.memory_space<vmem>>, %arg12: memref<1x6x32xf32, #tpu.memory_space<vmem>>, %arg13: memref<32x128xbf16, #tpu.memory_space<vmem>>, %arg14: memref<1x128xf32, #tpu.memory_space<vmem>>, %arg15: memref<2x8x128xf32, #tpu.memory_space<vmem>>, %arg16: memref<16x32xf32, #tpu.memory_space<vmem>>) attributes {dimension_semantics = [#tpu.dimension_semantics<parallel>, #tpu.dimension_semantics<arbitrary>], iteration_bounds = array<i64: 1, 2>, scalar_prefetch = 0 : i64, scratch_operands = 1 : i64, tpu.core_type = #tpu.core_type<tc>, window_params = [{transform_indices = @transform_0, window_bounds = array<i64: 2, 8, 4>}, {pipeline_mode = #tpu.pipeline_mode<synchronous>, transform_indices = @transform_1, window_bounds = array<i64: 16, 32>}, {pipeline_mode = #tpu.pipeline_mode<synchronous>, transform_indices = @transform_2, window_bounds = array<i64: 4, 32>}, {pipeline_mode = #tpu.pipeline_mode<synchronous>, transform_indices = @transform_3, window_bounds = array<i64: 1, 32>}, {transform_indices = @transform_4, window_bounds = array<i64: 1, 32, 96>}, {transform_indices = @transform_5, window_bounds = array<i64: 1, 1, 96>}, {transform_indices = @transform_6, window_bounds = array<i64: 1, 32, 32>}, {transform_indices = @transform_7, window_bounds = array<i64: 1, 32, 64>}, {transform_indices = @transform_8, window_bounds = array<i64: 1, 1, 64>}, {transform_indices = @transform_9, window_bounds = array<i64: 1, 64, 32>}, {transform_indices = @transform_10, window_bounds = array<i64: 1, 6, 32>}, {pipeline_mode = #tpu.pipeline_mode<synchronous>, transform_indices = @transform_11, window_bounds = array<i64: 32, 128>}, {pipeline_mode = #tpu.pipeline_mode<synchronous>, transform_indices = @transform_12, window_bounds = array<i64: 1, 128>}, {transform_indices = @transform_13, window_bounds = array<i64: 2, 8, 128>}]} {
    %c0_i32 = arith.constant 0 : i32
    %0 = arith.cmpi eq, %arg1, %c0_i32 : i32
    %1 = arith.extui %0 : i1 to i32
    %c0_i32_0 = arith.constant 0 : i32
    %2 = arith.cmpi ne, %1, %c0_i32_0 : i32
    scf.if %2 {
      %c0_56 = arith.constant 0 : index
      %c0_57 = arith.constant 0 : index
      %c0_58 = arith.constant 0 : index
      %185 = vector.load %arg2[%c0_56, %c0_57, %c0_58] : memref<2x8x4xf32, #tpu.memory_space<vmem>>, vector<2x8x4xf32>
      %186 = vector.shape_cast %185 : vector<2x8x4xf32> to vector<16x4xf32>
      %187 = arith.truncf %186 : vector<16x4xf32> to vector<16x4xbf16>
      %c0_59 = arith.constant 0 : index
      %c0_60 = arith.constant 0 : index
      %188 = vector.load %arg4[%c0_59, %c0_60] : memref<4x32xbf16, #tpu.memory_space<vmem>>, vector<4x32xbf16>
      %cst_61 = arith.constant dense<0.000000e+00> : vector<16x32xf32>
      %189 = tpu.matmul %187, %188, %cst_61 {dimension_numbers = #tpu.dot_dimension_numbers<[1], [0], [0], [1], [0, 0, 1, 1], [], []>} : vector<16x4xbf16>, vector<4x32xbf16>, vector<16x32xf32> -> vector<16x32xf32>
      %c0_62 = arith.constant 0 : index
      %c0_63 = arith.constant 0 : index
      %190 = vector.load %arg5[%c0_62, %c0_63] : memref<1x32xf32, #tpu.memory_space<vmem>>, vector<1x32xf32>
      %191 = vector.broadcast %190 : vector<1x32xf32> to vector<16x32xf32>
      %192 = arith.addf %189, %191 : vector<16x32xf32>
      %c0_64 = arith.constant 0 : index
      %c0_65 = arith.constant 0 : index
      %193 = vector.load %arg3[%c0_64, %c0_65] : memref<16x32xf32, #tpu.memory_space<vmem>>, vector<16x32xf32>
      %194 = arith.addf %192, %193 : vector<16x32xf32>
      %c0_66 = arith.constant 0 : index
      %c0_67 = arith.constant 0 : index
      %195 = vector.load %arg16[%c0_66, %c0_67] : memref<16x32xf32, #tpu.memory_space<vmem>>, vector<16x32xf32>
      tpu.vector_store %arg16[%c0_66, %c0_67], %194 {strides = array<i32>} : memref<16x32xf32, #tpu.memory_space<vmem>>, vector<16x32xf32>,
    } else {
    }
    %c0 = arith.constant 0 : index
    %c0_1 = arith.constant 0 : index
    %3 = vector.load %arg16[%c0, %c0_1] : memref<16x32xf32, #tpu.memory_space<vmem>>, vector<16x32xf32>
    %c0_2 = arith.constant 0 : index
    %c0_3 = arith.constant 0 : index
    %c0_4 = arith.constant 0 : index
    %4 = vector.load %arg12[%c0_2, %c0_3, %c0_4] : memref<1x6x32xf32, #tpu.memory_space<vmem>>, vector<1x6x32xf32>
    %5 = vector.shape_cast %4 : vector<1x6x32xf32> to vector<6x32xf32>
    %6 = vector.extract_strided_slice %5 {offsets = [0, 0], sizes = [1, 32], strides = [1, 1]} : vector<6x32xf32> to vector<1x32xf32>
    %7 = vector.extract_strided_slice %5 {offsets = [1, 0], sizes = [1, 32], strides = [1, 1]} : vector<6x32xf32> to vector<1x32xf32>
    %8 = vector.extract_strided_slice %5 {offsets = [2, 0], sizes = [1, 32], strides = [1, 1]} : vector<6x32xf32> to vector<1x32xf32>
    %9 = vector.extract_strided_slice %5 {offsets = [3, 0], sizes = [1, 32], strides = [1, 1]} : vector<6x32xf32> to vector<1x32xf32>
    %10 = vector.extract_strided_slice %5 {offsets = [4, 0], sizes = [1, 32], strides = [1, 1]} : vector<6x32xf32> to vector<1x32xf32>
    %11 = vector.extract_strided_slice %5 {offsets = [5, 0], sizes = [1, 32], strides = [1, 1]} : vector<6x32xf32> to vector<1x32xf32>
    %12 = arith.truncf %3 : vector<16x32xf32> to vector<16x32xbf16>
    %c0_5 = arith.constant 0 : index
    %c0_6 = arith.constant 0 : index
    %c0_7 = arith.constant 0 : index
    %13 = vector.load %arg6[%c0_5, %c0_6, %c0_7] : memref<1x32x96xbf16, #tpu.memory_space<vmem>>, vector<1x32x96xbf16>
    %14 = vector.shape_cast %13 : vector<1x32x96xbf16> to vector<32x96xbf16>
    %cst = arith.constant dense<0.000000e+00> : vector<16x96xf32>
    %15 = tpu.matmul %12, %14, %cst {dimension_numbers = #tpu.dot_dimension_numbers<[1], [0], [0], [1], [0, 0, 1, 1], [], []>} : vector<16x32xbf16>, vector<32x96xbf16>, vector<16x96xf32> -> vector<16x96xf32>
    %c0_8 = arith.constant 0 : index
    %c0_9 = arith.constant 0 : index
    %c0_10 = arith.constant 0 : index
    %16 = vector.load %arg7[%c0_8, %c0_9, %c0_10] : memref<1x1x96xf32, #tpu.memory_space<vmem>>, vector<1x1x96xf32>
    %17 = vector.shape_cast %16 : vector<1x1x96xf32> to vector<1x96xf32>
    %18 = vector.broadcast %17 : vector<1x96xf32> to vector<16x96xf32>
    %19 = arith.addf %15, %18 : vector<16x96xf32>
    %20 = vector.extract_strided_slice %19 {offsets = [0, 0], sizes = [16, 8], strides = [1, 1]} : vector<16x96xf32> to vector<16x8xf32>
    %21 = vector.shape_cast %20 : vector<16x8xf32> to vector<2x8x8xf32>
    %22 = arith.truncf %21 : vector<2x8x8xf32> to vector<2x8x8xbf16>
    %23 = vector.extract_strided_slice %19 {offsets = [0, 32], sizes = [16, 8], strides = [1, 1]} : vector<16x96xf32> to vector<16x8xf32>
    %24 = vector.shape_cast %23 : vector<16x8xf32> to vector<2x8x8xf32>
    %25 = arith.truncf %24 : vector<2x8x8xf32> to vector<2x8x8xbf16>
    %26 = vector.extract_strided_slice %19 {offsets = [0, 64], sizes = [16, 8], strides = [1, 1]} : vector<16x96xf32> to vector<16x8xf32>
    %27 = vector.shape_cast %26 : vector<16x8xf32> to vector<2x8x8xf32>
    %28 = arith.truncf %27 : vector<2x8x8xf32> to vector<2x8x8xbf16>
    "tpu.trace_start"() <{level = 10 : i32, message = "bqd,bkd->bqk"}> : () -> ()
    %cst_11 = arith.constant dense<0.000000e+00> : vector<2x8x8xf32>
    %29 = tpu.matmul %22, %25, %cst_11 {dimension_numbers = #tpu.dot_dimension_numbers<[2], [2], [1], [1], [0, 0, 0, 1, 1, 1], [0], [0]>} : vector<2x8x8xbf16>, vector<2x8x8xbf16>, vector<2x8x8xf32> -> vector<2x8x8xf32>
    "tpu.trace_stop"() : () -> ()
    %cst_12 = arith.constant dense<0xFF800000> : vector<2x8xf32>
    %30 = vector.multi_reduction <maximumf>, %29, %cst_12 [2] : vector<2x8x8xf32> to vector<2x8xf32>
    %31 = vector.shape_cast %30 : vector<2x8xf32> to vector<2x8x1xf32>
    %32 = vector.broadcast %31 : vector<2x8x1xf32> to vector<2x8x8xf32>
    %33 = arith.subf %29, %32 : vector<2x8x8xf32>
    %34 = math.exp %33 : vector<2x8x8xf32>
    %cst_13 = arith.constant dense<0.000000e+00> : vector<2x8xf32>
    %35 = vector.multi_reduction <add>, %34, %cst_13 [2] : vector<2x8x8xf32> to vector<2x8xf32>
    %36 = vector.shape_cast %35 : vector<2x8xf32> to vector<2x8x1xf32>
    %37 = tpu.reciprocal %36 {approx = true} : vector<2x8x1xf32> -> vector<2x8x1xf32>
    %38 = vector.broadcast %37 : vector<2x8x1xf32> to vector<2x8x8xf32>
    %39 = arith.mulf %34, %38 : vector<2x8x8xf32>
    %40 = arith.truncf %39 : vector<2x8x8xf32> to vector<2x8x8xbf16>
    "tpu.trace_start"() <{level = 10 : i32, message = "bqk,bkd->bqd"}> : () -> ()
    %cst_14 = arith.constant dense<0.000000e+00> : vector<2x8x8xf32>
    %41 = tpu.matmul %40, %28, %cst_14 {dimension_numbers = #tpu.dot_dimension_numbers<[2], [1], [1], [2], [0, 0, 0, 1, 1, 2], [0], [0]>} : vector<2x8x8xbf16>, vector<2x8x8xbf16>, vector<2x8x8xf32> -> vector<2x8x8xf32>
    "tpu.trace_stop"() : () -> ()
    %42 = vector.shape_cast %41 : vector<2x8x8xf32> to vector<16x8xf32>
    %43 = vector.extract_strided_slice %19 {offsets = [0, 8], sizes = [16, 8], strides = [1, 1]} : vector<16x96xf32> to vector<16x8xf32>
    %44 = vector.shape_cast %43 : vector<16x8xf32> to vector<2x8x8xf32>
    %45 = arith.truncf %44 : vector<2x8x8xf32> to vector<2x8x8xbf16>
    %46 = vector.extract_strided_slice %19 {offsets = [0, 40], sizes = [16, 8], strides = [1, 1]} : vector<16x96xf32> to vector<16x8xf32>
    %47 = vector.shape_cast %46 : vector<16x8xf32> to vector<2x8x8xf32>
    %48 = arith.truncf %47 : vector<2x8x8xf32> to vector<2x8x8xbf16>
    %49 = vector.extract_strided_slice %19 {offsets = [0, 72], sizes = [16, 8], strides = [1, 1]} : vector<16x96xf32> to vector<16x8xf32>
    %50 = vector.shape_cast %49 : vector<16x8xf32> to vector<2x8x8xf32>
    %51 = arith.truncf %50 : vector<2x8x8xf32> to vector<2x8x8xbf16>
    "tpu.trace_start"() <{level = 10 : i32, message = "bqd,bkd->bqk"}> : () -> ()
    %cst_15 = arith.constant dense<0.000000e+00> : vector<2x8x8xf32>
    %52 = tpu.matmul %45, %48, %cst_15 {dimension_numbers = #tpu.dot_dimension_numbers<[2], [2], [1], [1], [0, 0, 0, 1, 1, 1], [0], [0]>} : vector<2x8x8xbf16>, vector<2x8x8xbf16>, vector<2x8x8xf32> -> vector<2x8x8xf32>
    "tpu.trace_stop"() : () -> ()
    %cst_16 = arith.constant dense<0xFF800000> : vector<2x8xf32>
    %53 = vector.multi_reduction <maximumf>, %52, %cst_16 [2] : vector<2x8x8xf32> to vector<2x8xf32>
    %54 = vector.shape_cast %53 : vector<2x8xf32> to vector<2x8x1xf32>
    %55 = vector.broadcast %54 : vector<2x8x1xf32> to vector<2x8x8xf32>
    %56 = arith.subf %52, %55 : vector<2x8x8xf32>
    %57 = math.exp %56 : vector<2x8x8xf32>
    %cst_17 = arith.constant dense<0.000000e+00> : vector<2x8xf32>
    %58 = vector.multi_reduction <add>, %57, %cst_17 [2] : vector<2x8x8xf32> to vector<2x8xf32>
    %59 = vector.shape_cast %58 : vector<2x8xf32> to vector<2x8x1xf32>
    %60 = tpu.reciprocal %59 {approx = true} : vector<2x8x1xf32> -> vector<2x8x1xf32>
    %61 = vector.broadcast %60 : vector<2x8x1xf32> to vector<2x8x8xf32>
    %62 = arith.mulf %57, %61 : vector<2x8x8xf32>
    %63 = arith.truncf %62 : vector<2x8x8xf32> to vector<2x8x8xbf16>
    "tpu.trace_start"() <{level = 10 : i32, message = "bqk,bkd->bqd"}> : () -> ()
    %cst_18 = arith.constant dense<0.000000e+00> : vector<2x8x8xf32>
    %64 = tpu.matmul %63, %51, %cst_18 {dimension_numbers = #tpu.dot_dimension_numbers<[2], [1], [1], [2], [0, 0, 0, 1, 1, 2], [0], [0]>} : vector<2x8x8xbf16>, vector<2x8x8xbf16>, vector<2x8x8xf32> -> vector<2x8x8xf32>
    "tpu.trace_stop"() : () -> ()
    %65 = vector.shape_cast %64 : vector<2x8x8xf32> to vector<16x8xf32>
    %66 = vector.extract_strided_slice %19 {offsets = [0, 16], sizes = [16, 8], strides = [1, 1]} : vector<16x96xf32> to vector<16x8xf32>
    %67 = vector.shape_cast %66 : vector<16x8xf32> to vector<2x8x8xf32>
    %68 = arith.truncf %67 : vector<2x8x8xf32> to vector<2x8x8xbf16>
    %69 = vector.extract_strided_slice %19 {offsets = [0, 48], sizes = [16, 8], strides = [1, 1]} : vector<16x96xf32> to vector<16x8xf32>
    %70 = vector.shape_cast %69 : vector<16x8xf32> to vector<2x8x8xf32>
    %71 = arith.truncf %70 : vector<2x8x8xf32> to vector<2x8x8xbf16>
    %72 = vector.extract_strided_slice %19 {offsets = [0, 80], sizes = [16, 8], strides = [1, 1]} : vector<16x96xf32> to vector<16x8xf32>
    %73 = vector.shape_cast %72 : vector<16x8xf32> to vector<2x8x8xf32>
    %74 = arith.truncf %73 : vector<2x8x8xf32> to vector<2x8x8xbf16>
    "tpu.trace_start"() <{level = 10 : i32, message = "bqd,bkd->bqk"}> : () -> ()
    %cst_19 = arith.constant dense<0.000000e+00> : vector<2x8x8xf32>
    %75 = tpu.matmul %68, %71, %cst_19 {dimension_numbers = #tpu.dot_dimension_numbers<[2], [2], [1], [1], [0, 0, 0, 1, 1, 1], [0], [0]>} : vector<2x8x8xbf16>, vector<2x8x8xbf16>, vector<2x8x8xf32> -> vector<2x8x8xf32>
    "tpu.trace_stop"() : () -> ()
    %cst_20 = arith.constant dense<0xFF800000> : vector<2x8xf32>
    %76 = vector.multi_reduction <maximumf>, %75, %cst_20 [2] : vector<2x8x8xf32> to vector<2x8xf32>
    %77 = vector.shape_cast %76 : vector<2x8xf32> to vector<2x8x1xf32>
    %78 = vector.broadcast %77 : vector<2x8x1xf32> to vector<2x8x8xf32>
    %79 = arith.subf %75, %78 : vector<2x8x8xf32>
    %80 = math.exp %79 : vector<2x8x8xf32>
    %cst_21 = arith.constant dense<0.000000e+00> : vector<2x8xf32>
    %81 = vector.multi_reduction <add>, %80, %cst_21 [2] : vector<2x8x8xf32> to vector<2x8xf32>
    %82 = vector.shape_cast %81 : vector<2x8xf32> to vector<2x8x1xf32>
    %83 = tpu.reciprocal %82 {approx = true} : vector<2x8x1xf32> -> vector<2x8x1xf32>
    %84 = vector.broadcast %83 : vector<2x8x1xf32> to vector<2x8x8xf32>
    %85 = arith.mulf %80, %84 : vector<2x8x8xf32>
    %86 = arith.truncf %85 : vector<2x8x8xf32> to vector<2x8x8xbf16>
    "tpu.trace_start"() <{level = 10 : i32, message = "bqk,bkd->bqd"}> : () -> ()
    %cst_22 = arith.constant dense<0.000000e+00> : vector<2x8x8xf32>
    %87 = tpu.matmul %86, %74, %cst_22 {dimension_numbers = #tpu.dot_dimension_numbers<[2], [1], [1], [2], [0, 0, 0, 1, 1, 2], [0], [0]>} : vector<2x8x8xbf16>, vector<2x8x8xbf16>, vector<2x8x8xf32> -> vector<2x8x8xf32>
    "tpu.trace_stop"() : () -> ()
    %88 = vector.shape_cast %87 : vector<2x8x8xf32> to vector<16x8xf32>
    %89 = vector.extract_strided_slice %19 {offsets = [0, 24], sizes = [16, 8], strides = [1, 1]} : vector<16x96xf32> to vector<16x8xf32>
    %90 = vector.shape_cast %89 : vector<16x8xf32> to vector<2x8x8xf32>
    %91 = arith.truncf %90 : vector<2x8x8xf32> to vector<2x8x8xbf16>
    %92 = vector.extract_strided_slice %19 {offsets = [0, 56], sizes = [16, 8], strides = [1, 1]} : vector<16x96xf32> to vector<16x8xf32>
    %93 = vector.shape_cast %92 : vector<16x8xf32> to vector<2x8x8xf32>
    %94 = arith.truncf %93 : vector<2x8x8xf32> to vector<2x8x8xbf16>
    %95 = vector.extract_strided_slice %19 {offsets = [0, 88], sizes = [16, 8], strides = [1, 1]} : vector<16x96xf32> to vector<16x8xf32>
    %96 = vector.shape_cast %95 : vector<16x8xf32> to vector<2x8x8xf32>
    %97 = arith.truncf %96 : vector<2x8x8xf32> to vector<2x8x8xbf16>
    "tpu.trace_start"() <{level = 10 : i32, message = "bqd,bkd->bqk"}> : () -> ()
    %cst_23 = arith.constant dense<0.000000e+00> : vector<2x8x8xf32>
    %98 = tpu.matmul %91, %94, %cst_23 {dimension_numbers = #tpu.dot_dimension_numbers<[2], [2], [1], [1], [0, 0, 0, 1, 1, 1], [0], [0]>} : vector<2x8x8xbf16>, vector<2x8x8xbf16>, vector<2x8x8xf32> -> vector<2x8x8xf32>
    "tpu.trace_stop"() : () -> ()
    %cst_24 = arith.constant dense<0xFF800000> : vector<2x8xf32>
    %99 = vector.multi_reduction <maximumf>, %98, %cst_24 [2] : vector<2x8x8xf32> to vector<2x8xf32>
    %100 = vector.shape_cast %99 : vector<2x8xf32> to vector<2x8x1xf32>
    %101 = vector.broadcast %100 : vector<2x8x1xf32> to vector<2x8x8xf32>
    %102 = arith.subf %98, %101 : vector<2x8x8xf32>
    %103 = math.exp %102 : vector<2x8x8xf32>
    %cst_25 = arith.constant dense<0.000000e+00> : vector<2x8xf32>
    %104 = vector.multi_reduction <add>, %103, %cst_25 [2] : vector<2x8x8xf32> to vector<2x8xf32>
    %105 = vector.shape_cast %104 : vector<2x8xf32> to vector<2x8x1xf32>
    %106 = tpu.reciprocal %105 {approx = true} : vector<2x8x1xf32> -> vector<2x8x1xf32>
    %107 = vector.broadcast %106 : vector<2x8x1xf32> to vector<2x8x8xf32>
    %108 = arith.mulf %103, %107 : vector<2x8x8xf32>
    %109 = arith.truncf %108 : vector<2x8x8xf32> to vector<2x8x8xbf16>
    "tpu.trace_start"() <{level = 10 : i32, message = "bqk,bkd->bqd"}> : () -> ()
    %cst_26 = arith.constant dense<0.000000e+00> : vector<2x8x8xf32>
    %110 = tpu.matmul %109, %97, %cst_26 {dimension_numbers = #tpu.dot_dimension_numbers<[2], [1], [1], [2], [0, 0, 0, 1, 1, 2], [0], [0]>} : vector<2x8x8xbf16>, vector<2x8x8xbf16>, vector<2x8x8xf32> -> vector<2x8x8xf32>
    "tpu.trace_stop"() : () -> ()
    %111 = vector.shape_cast %110 : vector<2x8x8xf32> to vector<16x8xf32>
    %112 = tpu.concatenate %42, %65, %88, %111 in 1 : vector<16x8xf32>, vector<16x8xf32>, vector<16x8xf32>, vector<16x8xf32> -> vector<16x32xf32>
    %113 = arith.truncf %112 : vector<16x32xf32> to vector<16x32xbf16>
    %c0_27 = arith.constant 0 : index
    %c0_28 = arith.constant 0 : index
    %c0_29 = arith.constant 0 : index
    %114 = vector.load %arg8[%c0_27, %c0_28, %c0_29] : memref<1x32x32xbf16, #tpu.memory_space<vmem>>, vector<1x32x32xbf16>
    %115 = vector.shape_cast %114 : vector<1x32x32xbf16> to vector<32x32xbf16>
    %cst_30 = arith.constant dense<0.000000e+00> : vector<16x32xf32>
    %116 = tpu.matmul %113, %115, %cst_30 {dimension_numbers = #tpu.dot_dimension_numbers<[1], [0], [0], [1], [0, 0, 1, 1], [], []>} : vector<16x32xbf16>, vector<32x32xbf16>, vector<16x32xf32> -> vector<16x32xf32>
    %117 = vector.broadcast %6 : vector<1x32xf32> to vector<16x32xf32>
    %118 = arith.addf %116, %117 : vector<16x32xf32>
    %119 = arith.addf %3, %118 : vector<16x32xf32>
    %cst_31 = arith.constant dense<0.000000e+00> : vector<16xf32>
    %120 = vector.multi_reduction <add>, %119, %cst_31 [1] : vector<16x32xf32> to vector<16xf32>
    %121 = vector.shape_cast %120 : vector<16xf32> to vector<16x1xf32>
    %cst_32 = arith.constant 3.200000e+01 : f32
    %122 = vector.broadcast %cst_32 : f32 to vector<16x1xf32>
    %123 = arith.divf %121, %122 : vector<16x1xf32>
    %124 = vector.broadcast %123 : vector<16x1xf32> to vector<16x32xf32>
    %125 = arith.subf %119, %124 : vector<16x32xf32>
    %126 = arith.mulf %125, %125 : vector<16x32xf32>
    %cst_33 = arith.constant dense<0.000000e+00> : vector<16xf32>
    %127 = vector.multi_reduction <add>, %126, %cst_33 [1] : vector<16x32xf32> to vector<16xf32>
    %128 = vector.shape_cast %127 : vector<16xf32> to vector<16x1xf32>
    %cst_34 = arith.constant 3.200000e+01 : f32
    %129 = vector.broadcast %cst_34 : f32 to vector<16x1xf32>
    %130 = arith.divf %128, %129 : vector<16x1xf32>
    %131 = vector.broadcast %123 : vector<16x1xf32> to vector<16x32xf32>
    %132 = arith.subf %119, %131 : vector<16x32xf32>
    %cst_35 = arith.constant 9.99999974E-6 : f32
    %133 = vector.broadcast %cst_35 : f32 to vector<16x1xf32>
    %134 = arith.addf %130, %133 : vector<16x1xf32>
    %135 = math.rsqrt %134 : vector<16x1xf32>
    %136 = vector.broadcast %135 : vector<16x1xf32> to vector<16x32xf32>
    %137 = arith.mulf %132, %136 : vector<16x32xf32>
    %138 = vector.broadcast %8 : vector<1x32xf32> to vector<16x32xf32>
    %139 = arith.mulf %137, %138 : vector<16x32xf32>
    %140 = vector.broadcast %9 : vector<1x32xf32> to vector<16x32xf32>
    %141 = arith.addf %139, %140 : vector<16x32xf32>
    %142 = arith.truncf %141 : vector<16x32xf32> to vector<16x32xbf16>
    %c0_36 = arith.constant 0 : index
    %c0_37 = arith.constant 0 : index
    %c0_38 = arith.constant 0 : index
    %143 = vector.load %arg9[%c0_36, %c0_37, %c0_38] : memref<1x32x64xbf16, #tpu.memory_space<vmem>>, vector<1x32x64xbf16>
    %144 = vector.shape_cast %143 : vector<1x32x64xbf16> to vector<32x64xbf16>
    %cst_39 = arith.constant dense<0.000000e+00> : vector<16x64xf32>
    %145 = tpu.matmul %142, %144, %cst_39 {dimension_numbers = #tpu.dot_dimension_numbers<[1], [0], [0], [1], [0, 0, 1, 1], [], []>} : vector<16x32xbf16>, vector<32x64xbf16>, vector<16x64xf32> -> vector<16x64xf32>
    %c0_40 = arith.constant 0 : index
    %c0_41 = arith.constant 0 : index
    %c0_42 = arith.constant 0 : index
    %146 = vector.load %arg10[%c0_40, %c0_41, %c0_42] : memref<1x1x64xf32, #tpu.memory_space<vmem>>, vector<1x1x64xf32>
    %147 = vector.shape_cast %146 : vector<1x1x64xf32> to vector<1x64xf32>
    %148 = vector.broadcast %147 : vector<1x64xf32> to vector<16x64xf32>
    %149 = arith.addf %145, %148 : vector<16x64xf32>
    %cst_43 = arith.constant 0.000000e+00 : f32
    %150 = vector.broadcast %cst_43 : f32 to vector<16x64xf32>
    %151 = arith.maximumf %149, %150 : vector<16x64xf32>
    %152 = arith.truncf %151 : vector<16x64xf32> to vector<16x64xbf16>
    %c0_44 = arith.constant 0 : index
    %c0_45 = arith.constant 0 : index
    %c0_46 = arith.constant 0 : index
    %153 = vector.load %arg11[%c0_44, %c0_45, %c0_46] : memref<1x64x32xbf16, #tpu.memory_space<vmem>>, vector<1x64x32xbf16>
    %154 = vector.shape_cast %153 : vector<1x64x32xbf16> to vector<64x32xbf16>
    %cst_47 = arith.constant dense<0.000000e+00> : vector<16x32xf32>
    %155 = tpu.matmul %152, %154, %cst_47 {dimension_numbers = #tpu.dot_dimension_numbers<[1], [0], [0], [1], [0, 0, 1, 1], [], []>} : vector<16x64xbf16>, vector<64x32xbf16>, vector<16x32xf32> -> vector<16x32xf32>
    %156 = vector.broadcast %7 : vector<1x32xf32> to vector<16x32xf32>
    %157 = arith.addf %155, %156 : vector<16x32xf32>
    %158 = arith.addf %141, %157 : vector<16x32xf32>
    %cst_48 = arith.constant dense<0.000000e+00> : vector<16xf32>
    %159 = vector.multi_reduction <add>, %158, %cst_48 [1] : vector<16x32xf32> to vector<16xf32>
    %160 = vector.shape_cast %159 : vector<16xf32> to vector<16x1xf32>
    %cst_49 = arith.constant 3.200000e+01 : f32
    %161 = vector.broadcast %cst_49 : f32 to vector<16x1xf32>
    %162 = arith.divf %160, %161 : vector<16x1xf32>
    %163 = vector.broadcast %162 : vector<16x1xf32> to vector<16x32xf32>
    %164 = arith.subf %158, %163 : vector<16x32xf32>
    %165 = arith.mulf %164, %164 : vector<16x32xf32>
    %cst_50 = arith.constant dense<0.000000e+00> : vector<16xf32>
    %166 = vector.multi_reduction <add>, %165, %cst_50 [1] : vector<16x32xf32> to vector<16xf32>
    %167 = vector.shape_cast %166 : vector<16xf32> to vector<16x1xf32>
    %cst_51 = arith.constant 3.200000e+01 : f32
    %168 = vector.broadcast %cst_51 : f32 to vector<16x1xf32>
    %169 = arith.divf %167, %168 : vector<16x1xf32>
    %170 = vector.broadcast %162 : vector<16x1xf32> to vector<16x32xf32>
    %171 = arith.subf %158, %170 : vector<16x32xf32>
    %cst_52 = arith.constant 9.99999974E-6 : f32
    %172 = vector.broadcast %cst_52 : f32 to vector<16x1xf32>
    %173 = arith.addf %169, %172 : vector<16x1xf32>
    %174 = math.rsqrt %173 : vector<16x1xf32>
    %175 = vector.broadcast %174 : vector<16x1xf32> to vector<16x32xf32>
    %176 = arith.mulf %171, %175 : vector<16x32xf32>
    %177 = vector.broadcast %10 : vector<1x32xf32> to vector<16x32xf32>
    %178 = arith.mulf %176, %177 : vector<16x32xf32>
    %179 = vector.broadcast %11 : vector<1x32xf32> to vector<16x32xf32>
    %180 = arith.addf %178, %179 : vector<16x32xf32>
    %c0_53 = arith.constant 0 : index
    %c0_54 = arith.constant 0 : index
    %181 = vector.load %arg16[%c0_53, %c0_54] : memref<16x32xf32, #tpu.memory_space<vmem>>, vector<16x32xf32>
    tpu.vector_store %arg16[%c0_53, %c0_54], %180 {strides = array<i32>} : memref<16x32xf32, #tpu.memory_space<vmem>>, vector<16x32xf32>,
    %c1_i32 = arith.constant 1 : i32
    %182 = arith.cmpi eq, %arg1, %c1_i32 : i32
    %183 = arith.extui %182 : i1 to i32
    %c0_i32_55 = arith.constant 0 : i32
    %184 = arith.cmpi ne, %183, %c0_i32_55 : i32
    scf.if %184 {
      %185 = arith.truncf %180 : vector<16x32xf32> to vector<16x32xbf16>
      %c0_56 = arith.constant 0 : index
      %c0_57 = arith.constant 0 : index
      %186 = vector.load %arg13[%c0_56, %c0_57] : memref<32x128xbf16, #tpu.memory_space<vmem>>, vector<32x128xbf16>
      %cst_58 = arith.constant dense<0.000000e+00> : vector<16x128xf32>
      %187 = tpu.matmul %185, %186, %cst_58 {dimension_numbers = #tpu.dot_dimension_numbers<[1], [0], [0], [1], [0, 0, 1, 1], [], []>} : vector<16x32xbf16>, vector<32x128xbf16>, vector<16x128xf32> -> vector<16x128xf32>
      %c0_59 = arith.constant 0 : index
      %c0_60 = arith.constant 0 : index
      %188 = vector.load %arg14[%c0_59, %c0_60] : memref<1x128xf32, #tpu.memory_space<vmem>>, vector<1x128xf32>
      %189 = vector.broadcast %188 : vector<1x128xf32> to vector<16x128xf32>
      %190 = arith.addf %187, %189 : vector<16x128xf32>
      %191 = vector.shape_cast %190 : vector<16x128xf32> to vector<2x8x128xf32>
      %c0_61 = arith.constant 0 : index
      %c0_62 = arith.constant 0 : index
      %c0_63 = arith.constant 0 : index
      %192 = vector.load %arg15[%c0_61, %c0_62, %c0_63] : memref<2x8x128xf32, #tpu.memory_space<vmem>>, vector<2x8x128xf32>
      tpu.vector_store %arg15[%c0_61, %c0_62, %c0_63], %191 {strides = array<i32>} : memref<2x8x128xf32, #tpu.memory_space<vmem>>, vector<2x8x128xf32>,
    } else {
    }
    return
  }
  func.func @transform_0(%arg0: i32, %arg1: i32) -> (i32, i32, i32) {
    %c0_i32 = arith.constant 0 : i32
    %c0_i32_0 = arith.constant 0 : i32
    %c0_i32_1 = arith.constant 0 : i32
    return %arg0, %c0_i32, %c0_i32_0 : i32, i32, i32
  }
  func.func @transform_1(%arg0: i32, %arg1: i32) -> (i32, i32) {
    %c0_i32 = arith.constant 0 : i32
    %c0_i32_0 = arith.constant 0 : i32
    %c0_i32_1 = arith.constant 0 : i32
    return %c0_i32, %c0_i32_0 : i32, i32
  }
  func.func @transform_2(%arg0: i32, %arg1: i32) -> (i32, i32) {
    %c0_i32 = arith.constant 0 : i32
    %c0_i32_0 = arith.constant 0 : i32
    %c0_i32_1 = arith.constant 0 : i32
    return %c0_i32, %c0_i32_0 : i32, i32
  }
  func.func @transform_3(%arg0: i32, %arg1: i32) -> (i32, i32) {
    %c0_i32 = arith.constant 0 : i32
    %c0_i32_0 = arith.constant 0 : i32
    %c0_i32_1 = arith.constant 0 : i32
    return %c0_i32, %c0_i32_0 : i32, i32
  }
  func.func @transform_4(%arg0: i32, %arg1: i32) -> (i32, i32, i32) {
    %c0_i32 = arith.constant 0 : i32
    %c0_i32_0 = arith.constant 0 : i32
    %c0_i32_1 = arith.constant 0 : i32
    return %arg1, %c0_i32, %c0_i32_0 : i32, i32, i32
  }
  func.func @transform_5(%arg0: i32, %arg1: i32) -> (i32, i32, i32) {
    %c0_i32 = arith.constant 0 : i32
    %c0_i32_0 = arith.constant 0 : i32
    %c0_i32_1 = arith.constant 0 : i32
    return %arg1, %c0_i32, %c0_i32_0 : i32, i32, i32
  }
  func.func @transform_6(%arg0: i32, %arg1: i32) -> (i32, i32, i32) {
    %c0_i32 = arith.constant 0 : i32
    %c0_i32_0 = arith.constant 0 : i32
    %c0_i32_1 = arith.constant 0 : i32
    return %arg1, %c0_i32, %c0_i32_0 : i32, i32, i32
  }
  func.func @transform_7(%arg0: i32, %arg1: i32) -> (i32, i32, i32) {
    %c0_i32 = arith.constant 0 : i32
    %c0_i32_0 = arith.constant 0 : i32
    %c0_i32_1 = arith.constant 0 : i32
    return %arg1, %c0_i32, %c0_i32_0 : i32, i32, i32
  }
  func.func @transform_8(%arg0: i32, %arg1: i32) -> (i32, i32, i32) {
    %c0_i32 = arith.constant 0 : i32
    %c0_i32_0 = arith.constant 0 : i32
    %c0_i32_1 = arith.constant 0 : i32
    return %arg1, %c0_i32, %c0_i32_0 : i32, i32, i32
  }
  func.func @transform_9(%arg0: i32, %arg1: i32) -> (i32, i32, i32) {
    %c0_i32 = arith.constant 0 : i32
    %c0_i32_0 = arith.constant 0 : i32
    %c0_i32_1 = arith.constant 0 : i32
    return %arg1, %c0_i32, %c0_i32_0 : i32, i32, i32
  }
  func.func @transform_10(%arg0: i32, %arg1: i32) -> (i32, i32, i32) {
    %c0_i32 = arith.constant 0 : i32
    %c0_i32_0 = arith.constant 0 : i32
    %c0_i32_1 = arith.constant 0 : i32
    return %arg1, %c0_i32, %c0_i32_0 : i32, i32, i32
  }
  func.func @transform_11(%arg0: i32, %arg1: i32) -> (i32, i32) {
    %c0_i32 = arith.constant 0 : i32
    %c0_i32_0 = arith.constant 0 : i32
    %c0_i32_1 = arith.constant 0 : i32
    return %c0_i32, %c0_i32_0 : i32, i32
  }
  func.func @transform_12(%arg0: i32, %arg1: i32) -> (i32, i32) {
    %c0_i32 = arith.constant 0 : i32
    %c0_i32_0 = arith.constant 0 : i32
    %c0_i32_1 = arith.constant 0 : i32
    return %c0_i32, %c0_i32_0 : i32, i32
  }
  func.func @transform_13(%arg0: i32, %arg1: i32) -> (i32, i32, i32) {
    %c0_i32 = arith.constant 0 : i32
    %c0_i32_0 = arith.constant 0 : i32
    %c0_i32_1 = arith.constant 0 : i32
    return %arg0, %c0_i32, %c0_i32_0 : i32, i32, i32
  }
}

</mosaic_0001>

<llo_original>
// kernel: tpu_custom_call.1
$region0: #{tpu_custom_call.1}
  #allocation0 [shape = 'u32[]', space=smem, size = 0x4, offset = 0x4, fixed_abs, tag = 'smem constant byte address 0x4 - core index']
  #allocation1 [shape = 'u32[144,128]{1,0:T(1,128)}', space=vmem, size = 0x12000, scoped, tag = 'internal scratch']
  #allocation2 [shape = 'f32[16,32]{1,0:T(8,128)}', space=vmem, size = 0x2000, scoped, tag = 'scratch operand']
  %s0 = inlined_call_operand.vmem [shape: f32[2,8,4], index: 0, kind: input, shape index: {}]
  %s1 = inlined_call_operand.vmem [shape: f32[16,32], index: 1, kind: input, shape index: {}]
  %s2 = inlined_call_operand.hbm [shape: bf16[4,32], index: 2, kind: input, shape index: {}]
  %s3 = inlined_call_operand.hbm [shape: f32[1,32], index: 3, kind: input, shape index: {}]
  %s4 = inlined_call_operand.vmem [shape: bf16[2,32,96], index: 4, kind: input, shape index: {}]
  %s5 = inlined_call_operand.hbm [shape: f32[2,1,96], index: 5, kind: input, shape index: {}]
  %s6 = inlined_call_operand.vmem [shape: bf16[2,32,32], index: 6, kind: input, shape index: {}]
  %s7 = inlined_call_operand.vmem [shape: bf16[2,32,64], index: 7, kind: input, shape index: {}]
  %s8 = inlined_call_operand.vmem [shape: f32[2,1,64], index: 8, kind: input, shape index: {}]
  %s9 = inlined_call_operand.vmem [shape: bf16[2,64,32], index: 9, kind: input, shape index: {}]
  %s10 = inlined_call_operand.vmem [shape: f32[2,6,32], index: 10, kind: input, shape index: {}]
  %s11 = inlined_call_operand.vmem [shape: bf16[32,128], index: 11, kind: input, shape index: {}]
  %s12 = inlined_call_operand.vmem [shape: f32[1,128], index: 12, kind: input, shape index: {}]
  %s13 = inlined_call_operand.hbm [shape: f32[2,8,128], index: 13, kind: output, shape index: {}]
  %s14 = sld [smem:[#allocation0]]
  $region105: #{tpu_custom_call.1} parent=0
    _
  %s16 = ssub.s32 1, %s14
  %s17 = scalar_select 0, %s16, %s14
  $region1: #{tpu_custom_call.1} parent=0
    #allocation3 [shape = 'u8[1024]{0}', space=vmem, size = 0x400, scoped, tag = 'input window, operand 2, single buffered']
    #allocation4 [shape = 's32[2]{0}', space=sflag, size = 0x8, scoped, tag = 'scoped memory for tpu_custom_call.1']
    #allocation5 [shape = 's32[2]{0}', space=sflag, size = 0x8, scoped, tag = 'scoped memory for tpu_custom_call.1']
    #allocation6 [shape = 'u8[512]{0}', space=vmem, size = 0x400, scoped, tag = 'input window, operand 3, single buffered']
    #allocation7 [shape = 's32[1]{0}', space=sflag, size = 0x4, scoped, tag = 'scoped memory for tpu_custom_call.1']
    #allocation8 [shape = 'u8[1024]{0}', space=vmem, size = 0x400, scoped, tag = 'input window, operand 5']
    #allocation9 [shape = 'u8[8192]{0}', space=vmem, size = 0x2000, scoped, tag = 'output window, operand 0, single buffered']
    %18 = vsyncpa [#allocation4], 0
    %19 = vsyncpa [#allocation7], 0
    %20 = vsyncpa [#allocation5], 0
    loop: start=0, step=1, limit=4
    $region2: #{tpu_custom_call.1} parent=1 // loop_pre_header
      _
    $region3: #{tpu_custom_call.1} parent=1 // loop_header
      %s22 = sphi 0, %s26
      %p23 = scmp.ge.s32.totalorder %s22, 4
      %s29 = sphi 0, %s41
      %s30 = sphi 0, %s37
      %s31 = sphi 0, %s29
      %s32 = sphi 0, %s30
      %s33 = sphi 0, %s31
      %s34 = sphi 0, %s32
      %s44 = sphi 0, %s46
      %s47 = sphi 0, %s44
      %s48 = sphi 0, %s47
      %s64 = sphi 0, %s48
      %s68 = sphi 0, %s68
      %s70 = sphi 0, %s68
      %s71 = sphi 0, %s70
      %s85 = sphi 0, %s71
      %s89 = sphi 0, %s89
      %s91 = sphi 0, %s89
      %s92 = sphi 0, %s91
      %s106 = sphi 0, %s92
      %s110 = sphi 0, %s110
      %s112 = sphi 0, %s110
      %s113 = sphi 0, %s112
      %s127 = sphi 0, %s113
      %s133 = sphi 0, %s135
      %s136 = sphi 0, %s133
      %s137 = sphi 0, %s136
      %s153 = sphi 0, %s137
      %s159 = sphi 0, %s161
      %s162 = sphi 0, %s159
      %s163 = sphi 0, %s162
      %s179 = sphi 0, %s163
      %s185 = sphi 0, %s187
      %s188 = sphi 0, %s185
      %s189 = sphi 0, %s188
      %s205 = sphi 0, %s189
      %s211 = sphi 0, %s213
      %s214 = sphi 0, %s211
      %s215 = sphi 0, %s214
      %s231 = sphi 0, %s215
      %s237 = sphi 0, %s239
      %s240 = sphi 0, %s237
      %s241 = sphi 0, %s240
      %s257 = sphi 0, %s241
      %s263 = sphi 0, %s265
      %s266 = sphi 0, %s263
      %s267 = sphi 0, %s266
      %s283 = sphi 0, %s267
      %s289 = sphi 0, %s291
      %s292 = sphi 0, %s289
      %s293 = sphi 0, %s292
      %s309 = sphi 0, %s293
      %s313 = sphi 0, %s313
      %s315 = sphi 0, %s313
      %s316 = sphi 0, %s315
      %s330 = sphi 0, %s316
      %s334 = sphi 0, %s334
      %s336 = sphi 0, %s334
      %s337 = sphi 0, %s336
      %s351 = sphi 0, %s337
      %s357 = sphi 0, %s359
      %s360 = sphi 0, %s357
      %s361 = sphi 0, %s360
      %s377 = sphi 0, %s361
    $region4: #{tpu_custom_call.1} parent=1 // loop_header_branch
      %25 = sbr.rel (%p23) target = $region8
    $region5: #{tpu_custom_call.1} parent=1 // loop_body
      %s27 = ssub.s32 %s22, 1
      %s28 = ssub.s32 %s22, 2
      %s35 = sadd.s32 1, %s30
      %p36 = scmp.ge.s32.totalorder %s35, 2
      %s37 = scalar_select %p36, 0, %s35
      %s38 = sadd.s32 1, %s29
      %s39 = scalar_select %p36, %s38, %s29
      %p40 = scmp.ge.s32.totalorder %s39, 1
      %s41 = scalar_select %p40, 0, %s39
      %s42 = ssub.s32 %s29, %s41
      %p43 = scmp.eq.s32.totalorder %s42, 0
      %s45 = sadd.s32 %s44, 1
      %s46 = scalar_select %p43, %s44, %s45
      %p49 = pneg %p43
      %p50 = scmp.eq.s32.totalorder %s22, 1
      %p51 = por %p49, %p50
      %p52 = scmp.ne.s32.totalorder %s44, %s47
      %p53 = scmp.eq.s32.totalorder %s22, 0
      %p54 = por %p52, %p53
      %p55 = scmp.ne.s32.totalorder %s44, %s47
      %p56 = scmp.eq.s32.totalorder %s27, 1
      %p57 = por %p55, %p56
      %p58 = scmp.ne.s32.totalorder %s47, %s48
      %p59 = scmp.eq.s32.totalorder %s27, 0
      %p60 = por %p58, %p59
      %p61 = scmp.ne.s32.totalorder %s47, %s48
      %p62 = scmp.eq.s32.totalorder %s28, 1
      %p63 = por %p61, %p62
      %p65 = scmp.ne.s32.totalorder %s48, %s64
      %p66 = scmp.eq.s32.totalorder %s28, 0
      %p67 = por %p65, %p66
      %s69 = sadd.s32 %s68, 1
      %p72 = scmp.eq.s32.totalorder %s22, 1
      %p73 = scmp.ne.s32.totalorder %s68, %s70
      %p74 = scmp.eq.s32.totalorder %s22, 0
      %p75 = por %p73, %p74
      %p76 = scmp.ne.s32.totalorder %s68, %s70
      %p77 = scmp.eq.s32.totalorder %s27, 1
      %p78 = por %p76, %p77
      %p79 = scmp.ne.s32.totalorder %s70, %s71
      %p80 = scmp.eq.s32.totalorder %s27, 0
      %p81 = por %p79, %p80
      %p82 = scmp.ne.s32.totalorder %s70, %s71
      %p83 = scmp.eq.s32.totalorder %s28, 1
      %p84 = por %p82, %p83
      %p86 = scmp.ne.s32.totalorder %s71, %s85
      %p87 = scmp.eq.s32.totalorder %s28, 0
      %p88 = por %p86, %p87
      %s90 = sadd.s32 %s89, 1
      %p93 = scmp.eq.s32.totalorder %s22, 1
      %p94 = scmp.ne.s32.totalorder %s89, %s91
      %p95 = scmp.eq.s32.totalorder %s22, 0
      %p96 = por %p94, %p95
      %p97 = scmp.ne.s32.totalorder %s89, %s91
      %p98 = scmp.eq.s32.totalorder %s27, 1
      %p99 = por %p97, %p98
      %p100 = scmp.ne.s32.totalorder %s91, %s92
      %p101 = scmp.eq.s32.totalorder %s27, 0
      %p102 = por %p100, %p101
      %p103 = scmp.ne.s32.totalorder %s91, %s92
      %p104 = scmp.eq.s32.totalorder %s28, 1
      %p105 = por %p103, %p104
      %p107 = scmp.ne.s32.totalorder %s92, %s106
      %p108 = scmp.eq.s32.totalorder %s28, 0
      %p109 = por %p107, %p108
      %s111 = sadd.s32 %s110, 1
      %p114 = scmp.eq.s32.totalorder %s22, 1
      %p115 = scmp.ne.s32.totalorder %s110, %s112
      %p116 = scmp.eq.s32.totalorder %s22, 0
      %p117 = por %p115, %p116
      %p118 = scmp.ne.s32.totalorder %s110, %s112
      %p119 = scmp.eq.s32.totalorder %s27, 1
      %p120 = por %p118, %p119
      %p121 = scmp.ne.s32.totalorder %s112, %s113
      %p122 = scmp.eq.s32.totalorder %s27, 0
      %p123 = por %p121, %p122
      %p124 = scmp.ne.s32.totalorder %s112, %s113
      %p125 = scmp.eq.s32.totalorder %s28, 1
      %p126 = por %p124, %p125
      %p128 = scmp.ne.s32.totalorder %s113, %s127
      %p129 = scmp.eq.s32.totalorder %s28, 0
      %p130 = por %p128, %p129
      %s131 = ssub.s32 %s30, %s37
      %p132 = scmp.eq.s32.totalorder %s131, 0
      %s134 = sadd.s32 %s133, 1
      %s135 = scalar_select %p132, %s133, %s134
      %p138 = pneg %p132
      %p139 = scmp.eq.s32.totalorder %s22, 1
      %p140 = por %p138, %p139
      %p141 = scmp.ne.s32.totalorder %s133, %s136
      %p142 = scmp.eq.s32.totalorder %s22, 0
      %p143 = por %p141, %p142
      %p144 = scmp.ne.s32.totalorder %s133, %s136
      %p145 = scmp.eq.s32.totalorder %s27, 1
      %p146 = por %p144, %p145
      %p147 = scmp.ne.s32.totalorder %s136, %s137
      %p148 = scmp.eq.s32.totalorder %s27, 0
      %p149 = por %p147, %p148
      %p150 = scmp.ne.s32.totalorder %s136, %s137
      %p151 = scmp.eq.s32.totalorder %s28, 1
      %p152 = por %p150, %p151
      %p154 = scmp.ne.s32.totalorder %s137, %s153
      %p155 = scmp.eq.s32.totalorder %s28, 0
      %p156 = por %p154, %p155
      %s157 = ssub.s32 %s30, %s37
      %p158 = scmp.eq.s32.totalorder %s157, 0
      %s160 = sadd.s32 %s159, 1
      %s161 = scalar_select %p158, %s159, %s160
      %p164 = pneg %p158
      %p165 = scmp.eq.s32.totalorder %s22, 1
      %p166 = por %p164, %p165
      %p167 = scmp.ne.s32.totalorder %s159, %s162
      %p168 = scmp.eq.s32.totalorder %s22, 0
      %p169 = por %p167, %p168
      %p170 = scmp.ne.s32.totalorder %s159, %s162
      %p171 = scmp.eq.s32.totalorder %s27, 1
      %p172 = por %p170, %p171
      %p173 = scmp.ne.s32.totalorder %s162, %s163
      %p174 = scmp.eq.s32.totalorder %s27, 0
      %p175 = por %p173, %p174
      %p176 = scmp.ne.s32.totalorder %s162, %s163
      %p177 = scmp.eq.s32.totalorder %s28, 1
      %p178 = por %p176, %p177
      %p180 = scmp.ne.s32.totalorder %s163, %s179
      %p181 = scmp.eq.s32.totalorder %s28, 0
      %p182 = por %p180, %p181
      %s183 = ssub.s32 %s30, %s37
      %p184 = scmp.eq.s32.totalorder %s183, 0
      %s186 = sadd.s32 %s185, 1
      %s187 = scalar_select %p184, %s185, %s186
      %p190 = pneg %p184
      %p191 = scmp.eq.s32.totalorder %s22, 1
      %p192 = por %p190, %p191
      %p193 = scmp.ne.s32.totalorder %s185, %s188
      %p194 = scmp.eq.s32.totalorder %s22, 0
      %p195 = por %p193, %p194
      %p196 = scmp.ne.s32.totalorder %s185, %s188
      %p197 = scmp.eq.s32.totalorder %s27, 1
      %p198 = por %p196, %p197
      %p199 = scmp.ne.s32.totalorder %s188, %s189
      %p200 = scmp.eq.s32.totalorder %s27, 0
      %p201 = por %p199, %p200
      %p202 = scmp.ne.s32.totalorder %s188, %s189
      %p203 = scmp.eq.s32.totalorder %s28, 1
      %p204 = por %p202, %p203
      %p206 = scmp.ne.s32.totalorder %s189, %s205
      %p207 = scmp.eq.s32.totalorder %s28, 0
      %p208 = por %p206, %p207
      %s209 = ssub.s32 %s30, %s37
      %p210 = scmp.eq.s32.totalorder %s209, 0
      %s212 = sadd.s32 %s211, 1
      %s213 = scalar_select %p210, %s211, %s212
      %p216 = pneg %p210
      %p217 = scmp.eq.s32.totalorder %s22, 1
      %p218 = por %p216, %p217
      %p219 = scmp.ne.s32.totalorder %s211, %s214
      %p220 = scmp.eq.s32.totalorder %s22, 0
      %p221 = por %p219, %p220
      %p222 = scmp.ne.s32.totalorder %s211, %s214
      %p223 = scmp.eq.s32.totalorder %s27, 1
      %p224 = por %p222, %p223
      %p225 = scmp.ne.s32.totalorder %s214, %s215
      %p226 = scmp.eq.s32.totalorder %s27, 0
      %p227 = por %p225, %p226
      %p228 = scmp.ne.s32.totalorder %s214, %s215
      %p229 = scmp.eq.s32.totalorder %s28, 1
      %p230 = por %p228, %p229
      %p232 = scmp.ne.s32.totalorder %s215, %s231
      %p233 = scmp.eq.s32.totalorder %s28, 0
      %p234 = por %p232, %p233
      %s235 = ssub.s32 %s30, %s37
      %p236 = scmp.eq.s32.totalorder %s235, 0
      %s238 = sadd.s32 %s237, 1
      %s239 = scalar_select %p236, %s237, %s238
      %p242 = pneg %p236
      %p243 = scmp.eq.s32.totalorder %s22, 1
      %p244 = por %p242, %p243
      %p245 = scmp.ne.s32.totalorder %s237, %s240
      %p246 = scmp.eq.s32.totalorder %s22, 0
      %p247 = por %p245, %p246
      %p248 = scmp.ne.s32.totalorder %s237, %s240
      %p249 = scmp.eq.s32.totalorder %s27, 1
      %p250 = por %p248, %p249
      %p251 = scmp.ne.s32.totalorder %s240, %s241
      %p252 = scmp.eq.s32.totalorder %s27, 0
      %p253 = por %p251, %p252
      %p254 = scmp.ne.s32.totalorder %s240, %s241
      %p255 = scmp.eq.s32.totalorder %s28, 1
      %p256 = por %p254, %p255
      %p258 = scmp.ne.s32.totalorder %s241, %s257
      %p259 = scmp.eq.s32.totalorder %s28, 0
      %p260 = por %p258, %p259
      %s261 = ssub.s32 %s30, %s37
      %p262 = scmp.eq.s32.totalorder %s261, 0
      %s264 = sadd.s32 %s263, 1
      %s265 = scalar_select %p262, %s263, %s264
      %p268 = pneg %p262
      %p269 = scmp.eq.s32.totalorder %s22, 1
      %p270 = por %p268, %p269
      %p271 = scmp.ne.s32.totalorder %s263, %s266
      %p272 = scmp.eq.s32.totalorder %s22, 0
      %p273 = por %p271, %p272
      %p274 = scmp.ne.s32.totalorder %s263, %s266
      %p275 = scmp.eq.s32.totalorder %s27, 1
      %p276 = por %p274, %p275
      %p277 = scmp.ne.s32.totalorder %s266, %s267
      %p278 = scmp.eq.s32.totalorder %s27, 0
      %p279 = por %p277, %p278
      %p280 = scmp.ne.s32.totalorder %s266, %s267
      %p281 = scmp.eq.s32.totalorder %s28, 1
      %p282 = por %p280, %p281
      %p284 = scmp.ne.s32.totalorder %s267, %s283
      %p285 = scmp.eq.s32.totalorder %s28, 0
      %p286 = por %p284, %p285
      %s287 = ssub.s32 %s30, %s37
      %p288 = scmp.eq.s32.totalorder %s287, 0
      %s290 = sadd.s32 %s289, 1
      %s291 = scalar_select %p288, %s289, %s290
      %p294 = pneg %p288
      %p295 = scmp.eq.s32.totalorder %s22, 1
      %p296 = por %p294, %p295
      %p297 = scmp.ne.s32.totalorder %s289, %s292
      %p298 = scmp.eq.s32.totalorder %s22, 0
      %p299 = por %p297, %p298
      %p300 = scmp.ne.s32.totalorder %s289, %s292
      %p301 = scmp.eq.s32.totalorder %s27, 1
      %p302 = por %p300, %p301
      %p303 = scmp.ne.s32.totalorder %s292, %s293
      %p304 = scmp.eq.s32.totalorder %s27, 0
      %p305 = por %p303, %p304
      %p306 = scmp.ne.s32.totalorder %s292, %s293
      %p307 = scmp.eq.s32.totalorder %s28, 1
      %p308 = por %p306, %p307
      %p310 = scmp.ne.s32.totalorder %s293, %s309
      %p311 = scmp.eq.s32.totalorder %s28, 0
      %p312 = por %p310, %p311
      %s314 = sadd.s32 %s313, 1
      %p317 = scmp.eq.s32.totalorder %s22, 1
      %p318 = scmp.ne.s32.totalorder %s313, %s315
      %p319 = scmp.eq.s32.totalorder %s22, 0
      %p320 = por %p318, %p319
      %p321 = scmp.ne.s32.totalorder %s313, %s315
      %p322 = scmp.eq.s32.totalorder %s27, 1
      %p323 = por %p321, %p322
      %p324 = scmp.ne.s32.totalorder %s315, %s316
      %p325 = scmp.eq.s32.totalorder %s27, 0
      %p326 = por %p324, %p325
      %p327 = scmp.ne.s32.totalorder %s315, %s316
      %p328 = scmp.eq.s32.totalorder %s28, 1
      %p329 = por %p327, %p328
      %p331 = scmp.ne.s32.totalorder %s316, %s330
      %p332 = scmp.eq.s32.totalorder %s28, 0
      %p333 = por %p331, %p332
      %s335 = sadd.s32 %s334, 1
      %p338 = scmp.eq.s32.totalorder %s22, 1
      %p339 = scmp.ne.s32.totalorder %s334, %s336
      %p340 = scmp.eq.s32.totalorder %s22, 0
      %p341 = por %p339, %p340
      %p342 = scmp.ne.s32.totalorder %s334, %s336
      %p343 = scmp.eq.s32.totalorder %s27, 1
      %p344 = por %p342, %p343
      %p345 = scmp.ne.s32.totalorder %s336, %s337
      %p346 = scmp.eq.s32.totalorder %s27, 0
      %p347 = por %p345, %p346
      %p348 = scmp.ne.s32.totalorder %s336, %s337
      %p349 = scmp.eq.s32.totalorder %s28, 1
      %p350 = por %p348, %p349
      %p352 = scmp.ne.s32.totalorder %s337, %s351
      %p353 = scmp.eq.s32.totalorder %s28, 0
      %p354 = por %p352, %p353
      %s355 = ssub.s32 %s29, %s41
      %p356 = scmp.eq.s32.totalorder %s355, 0
      %s358 = sadd.s32 %s357, 1
      %s359 = scalar_select %p356, %s357, %s358
      %p362 = pneg %p356
      %p363 = scmp.eq.s32.totalorder %s22, 1
      %p364 = por %p362, %p363
      %p365 = scmp.ne.s32.totalorder %s357, %s360
      %p366 = scmp.eq.s32.totalorder %s22, 0
      %p367 = por %p365, %p366
      %p368 = scmp.ne.s32.totalorder %s357, %s360
      %p369 = scmp.eq.s32.totalorder %s27, 1
      %p370 = por %p368, %p369
      %p371 = scmp.ne.s32.totalorder %s360, %s361
      %p372 = scmp.eq.s32.totalorder %s27, 0
      %p373 = por %p371, %p372
      %p374 = scmp.ne.s32.totalorder %s360, %s361
      %p375 = scmp.eq.s32.totalorder %s28, 1
      %p376 = por %p374, %p375
      %p378 = scmp.ne.s32.totalorder %s361, %s377
      %p379 = scmp.eq.s32.totalorder %s28, 0
      %p380 = por %p378, %p379
      %p381 = scmp.le.s32.totalorder 1, %s22
      %p382 = scmp.lt.s32.totalorder %s22, 3
      %p383 = pnand %p381, %p382
      %p384 = pneg %p383
      // Predicated region
      $region9: #{tpu_custom_call.1} parent=5 // pred_check
        _
      $region10: #{tpu_custom_call.1} parent=5 // pred_check_branch
        %386 = sbr.rel (%p383) target = $region12
      $region11: #{tpu_custom_call.1} parent=5 // pred_region
        %s387 = ssub.s32 %s22, 1
        // Predicated region
        $region13: #{tpu_custom_call.1} parent=11 // pred_check
          %p388 = pneg %p60
        $region14: #{tpu_custom_call.1} parent=11 // pred_check_branch
          %390 = sbr.rel (%p388) target = $region16
        $region15: #{tpu_custom_call.1} parent=11 // pred_region
          %s391 = smul.u32 2, %s31
          %p392 = scmp.lt.s32.totalorder %s391, 1
          %s393 = scalar_select %p392, %s391, 1
          %s394 = smul.addr %s393, 8
          %s395 = scalar_lea.vmem %s0, %s394
          %s396 = smul.u32 2, %s31
        $region16: #{tpu_custom_call.1} parent=11 // pred_fallthru
          _
        // Predicated region
        $region17: #{tpu_custom_call.1} parent=11 // pred_check
          %p397 = pneg %p81
        $region18: #{tpu_custom_call.1} parent=11 // pred_check_branch
          %399 = sbr.rel (%p397) target = $region20
        $region19: #{tpu_custom_call.1} parent=11 // pred_region
          _
        $region20: #{tpu_custom_call.1} parent=11 // pred_fallthru
          _
        // Predicated region
        $region21: #{tpu_custom_call.1} parent=11 // pred_check
          %p400 = pneg %p102
        $region22: #{tpu_custom_call.1} parent=11 // pred_check_branch
          %402 = sbr.rel (%p400) target = $region24
        $region23: #{tpu_custom_call.1} parent=11 // pred_region
          %s404 = ssub.s32 32, 32
          %405 = vsyncadd [#allocation4], %s404
          %s407 = sshll.u32 [#allocation3], 4
          %s408 = int_to_ptr.vmem [resolvable:$true] %s407
          %410 = dma.hbm_to_vmem [thread:$0]  %s2, 32, %s408, [#allocation4]
        $region24: #{tpu_custom_call.1} parent=11 // pred_fallthru
          _
        // Predicated region
        $region25: #{tpu_custom_call.1} parent=11 // pred_check
          %p411 = pneg %p123
        $region26: #{tpu_custom_call.1} parent=11 // pred_check_branch
          %413 = sbr.rel (%p411) target = $region28
        $region27: #{tpu_custom_call.1} parent=11 // pred_region
          %s415 = ssub.s32 16, 16
          %416 = vsyncadd [#allocation7], %s415
          %s418 = sshll.u32 [#allocation6], 4
          %s419 = int_to_ptr.vmem [resolvable:$true] %s418
          %421 = dma.hbm_to_vmem [thread:$0]  %s3, 16, %s419, [#allocation7]
        $region28: #{tpu_custom_call.1} parent=11 // pred_fallthru
          _
        // Predicated region
        $region29: #{tpu_custom_call.1} parent=11 // pred_check
          %p422 = pneg %p326
        $region30: #{tpu_custom_call.1} parent=11 // pred_check_branch
          %424 = sbr.rel (%p422) target = $region32
        $region31: #{tpu_custom_call.1} parent=11 // pred_region
          _
        $region32: #{tpu_custom_call.1} parent=11 // pred_fallthru
          _
        // Predicated region
        $region33: #{tpu_custom_call.1} parent=11 // pred_check
          %p425 = pneg %p347
        $region34: #{tpu_custom_call.1} parent=11 // pred_check_branch
          %427 = sbr.rel (%p425) target = $region36
        $region35: #{tpu_custom_call.1} parent=11 // pred_region
          _
        $region36: #{tpu_custom_call.1} parent=11 // pred_fallthru
          _
      $region12: #{tpu_custom_call.1} parent=5 // pred_fallthru
        _
      %p428 = scmp.lt.s32.totalorder %s22, 2
      // Predicated region
      $region37: #{tpu_custom_call.1} parent=5 // pred_check
        %p429 = pneg %p428
      $region38: #{tpu_custom_call.1} parent=5 // pred_check_branch
        %431 = sbr.rel (%p429) target = $region40
      $region39: #{tpu_custom_call.1} parent=5 // pred_region
        // Predicated region
        $region41: #{tpu_custom_call.1} parent=39 // pred_check
          %p432 = pneg %p143
        $region42: #{tpu_custom_call.1} parent=39 // pred_check_branch
          %434 = sbr.rel (%p432) target = $region44
        $region43: #{tpu_custom_call.1} parent=39 // pred_region
          %p435 = scmp.lt.s32.totalorder %s30, 1
          %s436 = scalar_select %p435, %s30, 1
          %s437 = smul.addr %s436, 4
          %s438 = smul.addr %s437, 4
          %s439 = scalar_lea.vmem %s4, %s438
        $region44: #{tpu_custom_call.1} parent=39 // pred_fallthru
          _
        // Predicated region
        $region45: #{tpu_custom_call.1} parent=39 // pred_check
          %p440 = pneg %p169
        $region46: #{tpu_custom_call.1} parent=39 // pred_check_branch
          %442 = sbr.rel (%p440) target = $region48
        $region47: #{tpu_custom_call.1} parent=39 // pred_region
          %s443 = sand.u32 %s22, 1
          %s444 = scalar_lea.sflag [#allocation4], %s443
          %s445 = sand.u32 %s159, 1
          %s446 = scalar_lea.vmem [#allocation8], %s445
          %s448 = ssub.s32 16, 16
          %449 = vsyncadd %s444, %s448
          %s450 = smul.addr %s30, 16
          %s451 = scalar_lea.hbm %s5, %s450
          %s453 = sshll.u32 %s446, 4
          %s454 = int_to_ptr.vmem [resolvable:$true] %s453
          %456 = dma.hbm_to_vmem [thread:$0]  %s451, 16, %s454, %s444
        $region48: #{tpu_custom_call.1} parent=39 // pred_fallthru
          _
        // Predicated region
        $region49: #{tpu_custom_call.1} parent=39 // pred_check
          %p457 = pneg %p195
        $region50: #{tpu_custom_call.1} parent=39 // pred_check_branch
          %459 = sbr.rel (%p457) target = $region52
        $region51: #{tpu_custom_call.1} parent=39 // pred_region
          %p460 = scmp.lt.s32.totalorder %s30, 1
          %s461 = scalar_select %p460, %s30, 1
          %s462 = smul.addr %s461, 4
          %s463 = smul.addr %s462, 4
          %s464 = scalar_lea.vmem %s6, %s463
        $region52: #{tpu_custom_call.1} parent=39 // pred_fallthru
          _
        // Predicated region
        $region53: #{tpu_custom_call.1} parent=39 // pred_check
          %p465 = pneg %p221
        $region54: #{tpu_custom_call.1} parent=39 // pred_check_branch
          %467 = sbr.rel (%p465) target = $region56
        $region55: #{tpu_custom_call.1} parent=39 // pred_region
          %p468 = scmp.lt.s32.totalorder %s30, 1
          %s469 = scalar_select %p468, %s30, 1
          %s470 = smul.addr %s469, 4
          %s471 = smul.addr %s470, 4
          %s472 = scalar_lea.vmem %s7, %s471
        $region56: #{tpu_custom_call.1} parent=39 // pred_fallthru
          _
        // Predicated region
        $region57: #{tpu_custom_call.1} parent=39 // pred_check
          %p473 = pneg %p247
        $region58: #{tpu_custom_call.1} parent=39 // pred_check_branch
          %475 = sbr.rel (%p473) target = $region60
        $region59: #{tpu_custom_call.1} parent=39 // pred_region
          %p476 = scmp.lt.s32.totalorder %s30, 1
          %s477 = scalar_select %p476, %s30, 1
          %s478 = scalar_lea.vmem %s8, %s477
        $region60: #{tpu_custom_call.1} parent=39 // pred_fallthru
          _
        // Predicated region
        $region61: #{tpu_custom_call.1} parent=39 // pred_check
          %p479 = pneg %p273
        $region62: #{tpu_custom_call.1} parent=39 // pred_check_branch
          %481 = sbr.rel (%p479) target = $region64
        $region63: #{tpu_custom_call.1} parent=39 // pred_region
          %p482 = scmp.lt.s32.totalorder %s30, 1
          %s483 = scalar_select %p482, %s30, 1
          %s484 = smul.addr %s483, 8
          %s485 = smul.addr %s484, 4
          %s486 = scalar_lea.vmem %s9, %s485
        $region64: #{tpu_custom_call.1} parent=39 // pred_fallthru
          _
        // Predicated region
        $region65: #{tpu_custom_call.1} parent=39 // pred_check
          %p487 = pneg %p299
        $region66: #{tpu_custom_call.1} parent=39 // pred_check_branch
          %489 = sbr.rel (%p487) target = $region68
        $region67: #{tpu_custom_call.1} parent=39 // pred_region
          %p490 = scmp.lt.s32.totalorder %s30, 1
          %s491 = scalar_select %p490, %s30, 1
          %s492 = smul.addr %s491, 8
          %s493 = scalar_lea.vmem %s10, %s492
        $region68: #{tpu_custom_call.1} parent=39 // pred_fallthru
          _
      $region40: #{tpu_custom_call.1} parent=5 // pred_fallthru
        _
      %p494 = scmp.le.s32.totalorder 1, %s22
      %p495 = scmp.lt.s32.totalorder %s22, 3
      %p496 = pnand %p494, %p495
      %p497 = pneg %p496
      // Predicated region
      $region69: #{tpu_custom_call.1} parent=5 // pred_check
        _
      $region70: #{tpu_custom_call.1} parent=5 // pred_check_branch
        %499 = sbr.rel (%p496) target = $region72
      $region71: #{tpu_custom_call.1} parent=5 // pred_region
        %s500 = ssub.s32 %s22, 1
        // Predicated region
        $region73: #{tpu_custom_call.1} parent=71 // pred_check
          %p501 = pneg %p102
        $region74: #{tpu_custom_call.1} parent=71 // pred_check_branch
          %503 = sbr.rel (%p501) target = $region76
        $region75: #{tpu_custom_call.1} parent=71 // pred_region
          %504 = dma.done [#allocation4], 32
        $region76: #{tpu_custom_call.1} parent=71 // pred_fallthru
          _
        // Predicated region
        $region77: #{tpu_custom_call.1} parent=71 // pred_check
          %p505 = pneg %p123
        $region78: #{tpu_custom_call.1} parent=71 // pred_check_branch
          %507 = sbr.rel (%p505) target = $region80
        $region79: #{tpu_custom_call.1} parent=71 // pred_region
          %508 = dma.done [#allocation7], 16
        $region80: #{tpu_custom_call.1} parent=71 // pred_fallthru
          _
        %s509 = sand.u32 %s27, 1
        %s510 = scalar_lea.sflag [#allocation4], %s509
        %s511 = sand.u32 %s162, 1
        %s512 = scalar_lea.vmem [#allocation8], %s511
        // Predicated region
        $region81: #{tpu_custom_call.1} parent=71 // pred_check
          %p513 = pneg %p175
        $region82: #{tpu_custom_call.1} parent=71 // pred_check_branch
          %515 = sbr.rel (%p513) target = $region84
        $region83: #{tpu_custom_call.1} parent=71 // pred_region
          %516 = dma.done %s510, 16
        $region84: #{tpu_custom_call.1} parent=71 // pred_fallthru
          _
        %s517 = smul.u32 2, %s31
        %p518 = scmp.lt.s32.totalorder %s517, 1
        %s519 = scalar_select %p518, %s517, 1
        %s520 = smul.addr %s519, 8
        %s521 = scalar_lea.vmem %s0, %s520
        %p522 = pneg %p60
        %p523 = pneg %p57
        %p524 = pneg %p81
        %p525 = pneg %p78
        %p526 = pneg %p102
        %p527 = pneg %p99
        %p528 = pneg %p123
        %p529 = pneg %p120
        %p530 = scmp.lt.s32.totalorder %s32, 1
        %s531 = scalar_select %p530, %s32, 1
        %s532 = smul.addr %s531, 4
        %s533 = smul.addr %s532, 4
        %s534 = scalar_lea.vmem %s4, %s533
        %p535 = pneg %p149
        %p536 = pneg %p146
        %s537 = sand.u32 %s27, 1
        %s538 = scalar_lea.sflag [#allocation4], %s537
        %s539 = sand.u32 %s162, 1
        %s540 = scalar_lea.vmem [#allocation8], %s539
        %p541 = pneg %p175
        %p542 = pneg %p172
        %p543 = scmp.lt.s32.totalorder %s32, 1
        %s544 = scalar_select %p543, %s32, 1
        %s545 = smul.addr %s544, 4
        %s546 = smul.addr %s545, 4
        %s547 = scalar_lea.vmem %s6, %s546
        %p548 = pneg %p201
        %p549 = pneg %p198
        %p550 = scmp.lt.s32.totalorder %s32, 1
        %s551 = scalar_select %p550, %s32, 1
        %s552 = smul.addr %s551, 4
        %s553 = smul.addr %s552, 4
        %s554 = scalar_lea.vmem %s7, %s553
        %p555 = pneg %p227
        %p556 = pneg %p224
        %p557 = scmp.lt.s32.totalorder %s32, 1
        %s558 = scalar_select %p557, %s32, 1
        %s559 = scalar_lea.vmem %s8, %s558
        %p560 = pneg %p253
        %p561 = pneg %p250
        %p562 = scmp.lt.s32.totalorder %s32, 1
        %s563 = scalar_select %p562, %s32, 1
        %s564 = smul.addr %s563, 8
        %s565 = smul.addr %s564, 4
        %s566 = scalar_lea.vmem %s9, %s565
        %p567 = pneg %p279
        %p568 = pneg %p276
        %p569 = scmp.lt.s32.totalorder %s32, 1
        %s570 = scalar_select %p569, %s32, 1
        %s571 = smul.addr %s570, 8
        %s572 = scalar_lea.vmem %s10, %s571
        %p573 = pneg %p305
        %p574 = pneg %p302
        %p575 = pneg %p326
        %p576 = pneg %p323
        %p577 = pneg %p347
        %p578 = pneg %p344
        %p579 = pneg %p373
        %p580 = pneg %p370
        %s581 = smul.u32 2, %s31
        %p582 = scmp.lt.s32.totalorder %s581, 1
        %s583 = scalar_select %p582, %s581, 1
        %s584 = smul.addr %s583, 8
        %s585 = scalar_lea.vmem %s0, %s584
        %s586 = smul.u32 2, %s31
        %p587 = scmp.lt.s32.totalorder %s32, 1
        %s588 = scalar_select %p587, %s32, 1
        %s589 = smul.addr %s588, 4
        %s590 = smul.addr %s589, 4
        %s591 = scalar_lea.vmem %s4, %s590
        %p592 = scmp.lt.s32.totalorder %s32, 1
        %s593 = scalar_select %p592, %s32, 1
        %s594 = smul.addr %s593, 4
        %s595 = smul.addr %s594, 4
        %s596 = scalar_lea.vmem %s6, %s595
        %p597 = scmp.lt.s32.totalorder %s32, 1
        %s598 = scalar_select %p597, %s32, 1
        %s599 = smul.addr %s598, 4
        %s600 = smul.addr %s599, 4
        %s601 = scalar_lea.vmem %s7, %s600
        %p602 = scmp.lt.s32.totalorder %s32, 1
        %s603 = scalar_select %p602, %s32, 1
        %s604 = scalar_lea.vmem %s8, %s603
        %p605 = scmp.lt.s32.totalorder %s32, 1
        %s606 = scalar_select %p605, %s32, 1
        %s607 = smul.addr %s606, 8
        %s608 = smul.addr %s607, 4
        %s609 = scalar_lea.vmem %s9, %s608
        %p610 = scmp.lt.s32.totalorder %s32, 1
        %s611 = scalar_select %p610, %s32, 1
        %s612 = smul.addr %s611, 8
        %s613 = scalar_lea.vmem %s10, %s612
        %s614 = smul.u32 2, %s31
        %p616 = scmp.eq.s32.totalorder %s32, 0
        // Predicated region
        $region85: #{tpu_custom_call.1} parent=71 // pred_check
          %p617 = pneg %p616
        $region86: #{tpu_custom_call.1} parent=71 // pred_check_branch
          %619 = sbr.rel (%p617) target = $region88
        $region87: #{tpu_custom_call.1} parent=71 // pred_region
          %v620 = vld [vmem:[%s585] sm:$0xff]
          %v621 = vld [vmem:[%s585 + $0x8] sm:$0xff]
          %v622 = vpack.c.bf16 %v621, %v620
          %v623 = vld [vmem:[#allocation3] sm:$0x3]
          %v624 = vld [vmem:[#allocation6] sm:$0x1]
          %v626 = vlaneseq
          %v627 = vshrl.u32 %v626, 7
          %v628 = vsub.s32 0, %v627
          %v629 = vrot.slane %v624, %v628
          %vm631 = vcmask 31744
          %v633 = vsel %vm631, %v622, 0
          %vm635 = vcmask 1041408
          %v637 = vsel %vm635, %v623, 0
          %639 = vmatprep.subr.bf16.mxu0 0
          %640 = vmatpush1.bf16.msra.mxu0 0
          %641 = vmatprep.subr.bf16.mxu0 0
          %642 = vmatpush1.bf16.msra.mxu0 0
          %643 = vmatprep.subr.bf16.mxu0 0
          %644 = vmatpush1.bf16.msra.mxu0 0
          %645 = vmatprep.subr.bf16.mxu0 0
          %646 = vmatpush1.bf16.msra.mxu0 0
          %647 = vmatprep.subr.bf16.mxu0 0
          %648 = vmatpush1.bf16.msra.mxu0 0
          %649 = vmatprep.subr.bf16.mxu0 0
          %650 = vmatpush1.bf16.msra.mxu0 0
          %651 = vmatprep.subr.bf16.mxu0 0
          %652 = vmatpush1.bf16.msra.mxu0 0
          %653 = vmatprep.subr.bf16.mxu0 0
          %654 = vmatpush1.bf16.msra.mxu0 %v637
          %655 = vmatprep.subr.bf16.mxu0 0
          %656 = vmatpush2.bf16.msra.mxu0 0
          %657 = vmatprep.subr.bf16.mxu0 0
          %658 = vmatpush2.bf16.msra.mxu0 0
          %659 = vmatprep.subr.bf16.mxu0 0
          %660 = vmatpush2.bf16.msra.mxu0 0
          %661 = vmatprep.subr.bf16.mxu0 0
          %662 = vmatpush2.bf16.msra.mxu0 0
          %663 = vmatprep.subr.bf16.mxu0 0
          %664 = vmatpush2.bf16.msra.mxu0 0
          %665 = vmatprep.subr.bf16.mxu0 0
          %666 = vmatpush2.bf16.msra.mxu0 0
          %667 = vmatprep.subr.bf16.mxu0 0
          %668 = vmatpush2.bf16.msra.mxu0 0
          %669 = vmatprep.subr.bf16.mxu0 0
          %670 = vmatpush2.bf16.msra.mxu0 0
          %671 = vmatprep.mubr.bf16.mxu0 0
          %672 = vmatmul.mubr.bf16.gmra.mxu0 %v633
          %v673 = vpop.f32.mrf.mxu0
          %v674 = vadd.f32 %v629, %v673
          %v675 = vpop.f32.mrf.mxu0
          %v676 = vpop.f32.mrf.mxu0
          %v677 = vadd.f32 %v629, %v676
          %v678 = vpop.f32.mrf.mxu0
          %679 = vdwg.mxu0
          %v680 = vld [vmem:[%s1] sm:$0xff]
          %v681 = vld [vmem:[%s1 + $0x8] sm:$0xff]
          %v682 = vadd.f32 %v674, %v680
          %v683 = vadd.f32 %v677, %v681
          %vm684 = vcmask 261120
          %685 = vst.msk [vmem:[#allocation2] sm:$0xff] %vm684, %v682
          %686 = vst.msk [vmem:[#allocation2 + $0x8] sm:$0xff] %vm684, %v683
        $region88: #{tpu_custom_call.1} parent=71 // pred_fallthru
          _
        %v687 = vld [vmem:[#allocation2] sm:$0xff]
        %v688 = vld [vmem:[#allocation2 + $0x8] sm:$0xff]
        %v689 = vld [vmem:[%s613] sm:$0x3f]
        %v690 = vpack.c.bf16 %v688, %v687
        %v691 = vld [vmem:[%s591] sm:$0xf]
        %v692 = vld [vmem:[%s591 + $0x4] sm:$0xf]
        %v693 = vld [vmem:[%s591 + $0x8] sm:$0xf]
        %v694 = vld [vmem:[%s591 + $0xc] sm:$0xf]
        %v695 = vld [vmem:[%s512] sm:$0x1]
        %v697 = vlaneseq
        %v698 = vshrl.u32 %v697, 7
        %v699 = vsub.s32 0, %v698
        %v700 = vrot.slane %v695, %v699
        %v706 = vunpack.c.l.b16 %v691
        %v707 = vunpack.c.l.b16 %v692
        %v708 = vunpack.c.l.b16 %v693
        %v709 = vunpack.c.l.b16 %v694
        %v710 = vpack.c.b16 %v707, %v706
        %v711 = vpack.c.b16 %v709, %v708
        %vm714 = vcmask 261120
        %v716 = vsel %vm714, %v690, 0
        %718 = vmatprep.subr.bf16.mxu0 0
        %719 = vmatpush1.bf16.msra.mxu0 0
        %720 = vmatprep.subr.bf16.mxu0 0
        %721 = vmatpush1.bf16.msra.mxu0 0
        %722 = vmatprep.subr.bf16.mxu0 0
        %723 = vmatpush1.bf16.msra.mxu0 0
        %724 = vmatprep.subr.bf16.mxu0 0
        %725 = vmatpush1.bf16.msra.mxu0 0
        %726 = vmatprep.subr.bf16.mxu0 0
        %727 = vmatpush1.bf16.msra.mxu0 0
        %728 = vmatprep.subr.bf16.mxu0 0
        %729 = vmatpush1.bf16.msra.mxu0 0
        %730 = vmatprep.subr.bf16.mxu0 0
        %731 = vmatpush1.bf16.msra.mxu0 %v711
        %732 = vmatprep.subr.bf16.mxu0 0
        %733 = vmatpush1.bf16.msra.mxu0 %v710
        %734 = vmatprep.subr.bf16.mxu0 0
        %735 = vmatpush2.bf16.msra.mxu0 0
        %736 = vmatprep.subr.bf16.mxu0 0
        %737 = vmatpush2.bf16.msra.mxu0 0
        %738 = vmatprep.subr.bf16.mxu0 0
        %739 = vmatpush2.bf16.msra.mxu0 0
        %740 = vmatprep.subr.bf16.mxu0 0
        %741 = vmatpush2.bf16.msra.mxu0 0
        %742 = vmatprep.subr.bf16.mxu0 0
        %743 = vmatpush2.bf16.msra.mxu0 0
        %744 = vmatprep.subr.bf16.mxu0 0
        %745 = vmatpush2.bf16.msra.mxu0 0
        %746 = vmatprep.subr.bf16.mxu0 0
        %747 = vmatpush2.bf16.msra.mxu0 0
        %748 = vmatprep.subr.bf16.mxu0 0
        %749 = vmatpush2.bf16.msra.mxu0 0
        %750 = vmatprep.mubr.bf16.mxu0 0
        %751 = vmatmul.mubr.bf16.gmra.mxu0 %v716
        %v752 = vpop.f32.mrf.mxu0
        %v753 = vadd.f32 %v700, %v752
        %v754 = vpop.f32.mrf.mxu0
        %v755 = vpop.f32.mrf.mxu0
        %v756 = vadd.f32 %v700, %v755
        %v757 = vpop.f32.mrf.mxu0
        %758 = vdwg.mxu0
        %v759 = vpack.c.bf16 %v753, %v753
        %v760 = vpack.c.bf16 %v756, %v756
        %762 = vrot.lane.b32.xlu0 %v759, 96
        %v763 = vpop.permute.xlu0 %762
        %vm764 = vcmask 64512
        %v766 = vsel %vm764, %v759, 0
        %v769 = vsel %vm764, %v763, 0
        %771 = vmatprep.subr.bf16.mxu0 0
        %772 = vmatpush1.bf16.xpose.msra.mxu0 0
        %773 = vmatprep.subr.bf16.mxu0 0
        %774 = vmatpush1.bf16.xpose.msra.mxu0 0
        %775 = vmatprep.subr.bf16.mxu0 0
        %776 = vmatpush1.bf16.xpose.msra.mxu0 0
        %777 = vmatprep.subr.bf16.mxu0 0
        %778 = vmatpush1.bf16.xpose.msra.mxu0 0
        %779 = vmatprep.subr.bf16.mxu0 0
        %780 = vmatpush1.bf16.xpose.msra.mxu0 0
        %781 = vmatprep.subr.bf16.mxu0 0
        %782 = vmatpush1.bf16.xpose.msra.mxu0 0
        %783 = vmatprep.subr.bf16.mxu0 0
        %784 = vmatpush1.bf16.xpose.msra.mxu0 0
        %785 = vmatprep.subr.bf16.mxu0 0
        %786 = vmatpush1.bf16.xpose.msra.mxu0 %v769
        %787 = vmatprep.subr.bf16.mxu0 0
        %788 = vmatpush2.bf16.xpose.msra.mxu0 0
        %789 = vmatprep.subr.bf16.mxu0 0
        %790 = vmatpush2.bf16.xpose.msra.mxu0 0
        %791 = vmatprep.subr.bf16.mxu0 0
        %792 = vmatpush2.bf16.xpose.msra.mxu0 0
        %793 = vmatprep.subr.bf16.mxu0 0
        %794 = vmatpush2.bf16.xpose.msra.mxu0 0
        %795 = vmatprep.subr.bf16.mxu0 0
        %796 = vmatpush2.bf16.xpose.msra.mxu0 0
        %797 = vmatprep.subr.bf16.mxu0 0
        %798 = vmatpush2.bf16.xpose.msra.mxu0 0
        %799 = vmatprep.subr.bf16.mxu0 0
        %800 = vmatpush2.bf16.xpose.msra.mxu0 0
        %801 = vmatprep.subr.bf16.mxu0 0
        %802 = vmatpush2.bf16.xpose.msra.mxu0 0
        %803 = vmatprep.mubr.bf16.mxu0 0
        %804 = vmatmul.mubr.bf16.gmra.mxu0 %v766
        %v805 = vpop.f32.mrf.mxu0
        %v806 = vadd.f32 0.0, %v805
        %v807 = vpop.f32.mrf.mxu0
        %v808 = vpop.f32.mrf.mxu0
        %v809 = vpop.f32.mrf.mxu0
        %810 = vdwg.mxu0
        %812 = vrot.lane.b32.xlu0 %v760, 96
        %v813 = vpop.permute.xlu0 %812
        %v815 = vsel %vm764, %v760, 0
        %v818 = vsel %vm764, %v813, 0
        %820 = vmatprep.subr.bf16.mxu0 0
        %821 = vmatpush1.bf16.xpose.msra.mxu0 0
        %822 = vmatprep.subr.bf16.mxu0 0
        %823 = vmatpush1.bf16.xpose.msra.mxu0 0
        %824 = vmatprep.subr.bf16.mxu0 0
        %825 = vmatpush1.bf16.xpose.msra.mxu0 0
        %826 = vmatprep.subr.bf16.mxu0 0
        %827 = vmatpush1.bf16.xpose.msra.mxu0 0
        %828 = vmatprep.subr.bf16.mxu0 0
        %829 = vmatpush1.bf16.xpose.msra.mxu0 0
        %830 = vmatprep.subr.bf16.mxu0 0
        %831 = vmatpush1.bf16.xpose.msra.mxu0 0
        %832 = vmatprep.subr.bf16.mxu0 0
        %833 = vmatpush1.bf16.xpose.msra.mxu0 0
        %834 = vmatprep.subr.bf16.mxu0 0
        %835 = vmatpush1.bf16.xpose.msra.mxu0 %v818
        %836 = vmatprep.subr.bf16.mxu0 0
        %837 = vmatpush2.bf16.xpose.msra.mxu0 0
        %838 = vmatprep.subr.bf16.mxu0 0
        %839 = vmatpush2.bf16.xpose.msra.mxu0 0
        %840 = vmatprep.subr.bf16.mxu0 0
        %841 = vmatpush2.bf16.xpose.msra.mxu0 0
        %842 = vmatprep.subr.bf16.mxu0 0
        %843 = vmatpush2.bf16.xpose.msra.mxu0 0
        %844 = vmatprep.subr.bf16.mxu0 0
        %845 = vmatpush2.bf16.xpose.msra.mxu0 0
        %846 = vmatprep.subr.bf16.mxu0 0
        %847 = vmatpush2.bf16.xpose.msra.mxu0 0
        %848 = vmatprep.subr.bf16.mxu0 0
        %849 = vmatpush2.bf16.xpose.msra.mxu0 0
        %850 = vmatprep.subr.bf16.mxu0 0
        %851 = vmatpush2.bf16.xpose.msra.mxu0 0
        %852 = vmatprep.mubr.bf16.mxu0 0
        %853 = vmatmul.mubr.bf16.gmra.mxu0 %v815
        %v854 = vpop.f32.mrf.mxu0
        %v855 = vadd.f32 0.0, %v854
        %v856 = vpop.f32.mrf.mxu0
        %v857 = vpop.f32.mrf.mxu0
        %v858 = vpop.f32.mrf.mxu0
        %859 = vdwg.mxu0
        %v860 = vsel %vm764, %v806, -inf
        %861 = vmax.xlane.f32.xlu0 %v860
        %v862 = vpop.xlane.xlu0 %861
        %v863 = vsel %vm764, %v855, -inf
        %864 = vmax.xlane.f32.xlu0 %v863
        %v865 = vpop.xlane.xlu0 %864
        %v866 = vsub.f32 %v806, %v862
        %v867 = vsub.f32 %v855, %v865
        %v868 = vmul.f32 %v866, 1.442695
        %v869 = vpow.pop %v868
        %v870 = vmul.f32 %v867, 1.442695
        %v871 = vpow.pop %v870
        %v872 = vsel %vm764, %v869, 0.0
        %873 = vadd.xlane.f32.xlu0 %v872
        %v874 = vpop.xlane.xlu0 %873
        %v875 = vsel %vm764, %v871, 0.0
        %876 = vadd.xlane.f32.xlu0 %v875
        %v877 = vpop.xlane.xlu0 %876
        %v878 = vrcp.pop %v874
        %v879 = vrcp.pop %v877
        %v880 = vmul.f32 %v869, %v878
        %v881 = vmul.f32 %v871, %v879
        %v882 = vpack.c.bf16 %v880, %v880
        %v883 = vpack.c.bf16 %v881, %v881
        %884 = vrot.lane.b32.xlu0 %v759, 64
        %v885 = vpop.permute.xlu0 %884
        %v887 = vsel %vm764, %v882, 0
        %vm889 = vcmask 1043456
        %v891 = vsel %vm889, %v885, 0
        %893 = vmatprep.subr.bf16.mxu0 0
        %894 = vmatpush1.bf16.msra.mxu0 0
        %895 = vmatprep.subr.bf16.mxu0 0
        %896 = vmatpush1.bf16.msra.mxu0 0
        %897 = vmatprep.subr.bf16.mxu0 0
        %898 = vmatpush1.bf16.msra.mxu0 0
        %899 = vmatprep.subr.bf16.mxu0 0
        %900 = vmatpush1.bf16.msra.mxu0 0
        %901 = vmatprep.subr.bf16.mxu0 0
        %902 = vmatpush1.bf16.msra.mxu0 0
        %903 = vmatprep.subr.bf16.mxu0 0
        %904 = vmatpush1.bf16.msra.mxu0 0
        %905 = vmatprep.subr.bf16.mxu0 0
        %906 = vmatpush1.bf16.msra.mxu0 0
        %907 = vmatprep.subr.bf16.mxu0 0
        %908 = vmatpush1.bf16.msra.mxu0 %v891
        %909 = vmatprep.subr.bf16.mxu0 0
        %910 = vmatpush2.bf16.msra.mxu0 0
        %911 = vmatprep.subr.bf16.mxu0 0
        %912 = vmatpush2.bf16.msra.mxu0 0
        %913 = vmatprep.subr.bf16.mxu0 0
        %914 = vmatpush2.bf16.msra.mxu0 0
        %915 = vmatprep.subr.bf16.mxu0 0
        %916 = vmatpush2.bf16.msra.mxu0 0
        %917 = vmatprep.subr.bf16.mxu0 0
        %918 = vmatpush2.bf16.msra.mxu0 0
        %919 = vmatprep.subr.bf16.mxu0 0
        %920 = vmatpush2.bf16.msra.mxu0 0
        %921 = vmatprep.subr.bf16.mxu0 0
        %922 = vmatpush2.bf16.msra.mxu0 0
        %923 = vmatprep.subr.bf16.mxu0 0
        %924 = vmatpush2.bf16.msra.mxu0 0
        %925 = vmatprep.mubr.bf16.mxu0 0
        %926 = vmatmul.mubr.bf16.gmra.mxu0 %v887
        %v927 = vpop.f32.mrf.mxu0
        %v928 = vadd.f32 0.0, %v927
        %v929 = vpop.f32.mrf.mxu0
        %v930 = vpop.f32.mrf.mxu0
        %v931 = vpop.f32.mrf.mxu0
        %932 = vdwg.mxu0
        %933 = vrot.lane.b32.xlu0 %v760, 64
        %v934 = vpop.permute.xlu0 %933
        %v936 = vsel %vm764, %v883, 0
        %v939 = vsel %vm889, %v934, 0
        %941 = vmatprep.subr.bf16.mxu0 0
        %942 = vmatpush1.bf16.msra.mxu0 0
        %943 = vmatprep.subr.bf16.mxu0 0
        %944 = vmatpush1.bf16.msra.mxu0 0
        %945 = vmatprep.subr.bf16.mxu0 0
        %946 = vmatpush1.bf16.msra.mxu0 0
        %947 = vmatprep.subr.bf16.mxu0 0
        %948 = vmatpush1.bf16.msra.mxu0 0
        %949 = vmatprep.subr.bf16.mxu0 0
        %950 = vmatpush1.bf16.msra.mxu0 0
        %951 = vmatprep.subr.bf16.mxu0 0
        %952 = vmatpush1.bf16.msra.mxu0 0
        %953 = vmatprep.subr.bf16.mxu0 0
        %954 = vmatpush1.bf16.msra.mxu0 0
        %955 = vmatprep.subr.bf16.mxu0 0
        %956 = vmatpush1.bf16.msra.mxu0 %v939
        %957 = vmatprep.subr.bf16.mxu0 0
        %958 = vmatpush2.bf16.msra.mxu0 0
        %959 = vmatprep.subr.bf16.mxu0 0
        %960 = vmatpush2.bf16.msra.mxu0 0
        %961 = vmatprep.subr.bf16.mxu0 0
        %962 = vmatpush2.bf16.msra.mxu0 0
        %963 = vmatprep.subr.bf16.mxu0 0
        %964 = vmatpush2.bf16.msra.mxu0 0
        %965 = vmatprep.subr.bf16.mxu0 0
        %966 = vmatpush2.bf16.msra.mxu0 0
        %967 = vmatprep.subr.bf16.mxu0 0
        %968 = vmatpush2.bf16.msra.mxu0 0
        %969 = vmatprep.subr.bf16.mxu0 0
        %970 = vmatpush2.bf16.msra.mxu0 0
        %971 = vmatprep.subr.bf16.mxu0 0
        %972 = vmatpush2.bf16.msra.mxu0 0
        %973 = vmatprep.mubr.bf16.mxu0 0
        %974 = vmatmul.mubr.bf16.gmra.mxu0 %v936
        %v975 = vpop.f32.mrf.mxu0
        %v976 = vadd.f32 0.0, %v975
        %v977 = vpop.f32.mrf.mxu0
        %v978 = vpop.f32.mrf.mxu0
        %v979 = vpop.f32.mrf.mxu0
        %980 = vdwg.mxu0
        %981 = vrot.lane.b32.xlu0 %v759, 120
        %v982 = vpop.permute.xlu0 %981
        %983 = vrot.lane.b32.xlu0 %v759, 88
        %v984 = vpop.permute.xlu0 %983
        %v986 = vsel %vm764, %v982, 0
        %v989 = vsel %vm764, %v984, 0
        %991 = vmatprep.subr.bf16.mxu0 0
        %992 = vmatpush1.bf16.xpose.msra.mxu0 0
        %993 = vmatprep.subr.bf16.mxu0 0
        %994 = vmatpush1.bf16.xpose.msra.mxu0 0
        %995 = vmatprep.subr.bf16.mxu0 0
        %996 = vmatpush1.bf16.xpose.msra.mxu0 0
        %997 = vmatprep.subr.bf16.mxu0 0
        %998 = vmatpush1.bf16.xpose.msra.mxu0 0
        %999 = vmatprep.subr.bf16.mxu0 0
        %1000 = vmatpush1.bf16.xpose.msra.mxu0 0
        %1001 = vmatprep.subr.bf16.mxu0 0
        %1002 = vmatpush1.bf16.xpose.msra.mxu0 0
        %1003 = vmatprep.subr.bf16.mxu0 0
        %1004 = vmatpush1.bf16.xpose.msra.mxu0 0
        %1005 = vmatprep.subr.bf16.mxu0 0
        %1006 = vmatpush1.bf16.xpose.msra.mxu0 %v989
        %1007 = vmatprep.subr.bf16.mxu0 0
        %1008 = vmatpush2.bf16.xpose.msra.mxu0 0
        %1009 = vmatprep.subr.bf16.mxu0 0
        %1010 = vmatpush2.bf16.xpose.msra.mxu0 0
        %1011 = vmatprep.subr.bf16.mxu0 0
        %1012 = vmatpush2.bf16.xpose.msra.mxu0 0
        %1013 = vmatprep.subr.bf16.mxu0 0
        %1014 = vmatpush2.bf16.xpose.msra.mxu0 0
        %1015 = vmatprep.subr.bf16.mxu0 0
        %1016 = vmatpush2.bf16.xpose.msra.mxu0 0
        %1017 = vmatprep.subr.bf16.mxu0 0
        %1018 = vmatpush2.bf16.xpose.msra.mxu0 0
        %1019 = vmatprep.subr.bf16.mxu0 0
        %1020 = vmatpush2.bf16.xpose.msra.mxu0 0
        %1021 = vmatprep.subr.bf16.mxu0 0
        %1022 = vmatpush2.bf16.xpose.msra.mxu0 0
        %1023 = vmatprep.mubr.bf16.mxu0 0
        %1024 = vmatmul.mubr.bf16.gmra.mxu0 %v986
        %v1025 = vpop.f32.mrf.mxu0
        %v1026 = vadd.f32 0.0, %v1025
        %v1027 = vpop.f32.mrf.mxu0
        %v1028 = vpop.f32.mrf.mxu0
        %v1029 = vpop.f32.mrf.mxu0
        %1030 = vdwg.mxu0
        %1031 = vrot.lane.b32.xlu0 %v760, 120
        %v1032 = vpop.permute.xlu0 %1031
        %1033 = vrot.lane.b32.xlu0 %v760, 88
        %v1034 = vpop.permute.xlu0 %1033
        %v1036 = vsel %vm764, %v1032, 0
        %v1039 = vsel %vm764, %v1034, 0
        %1041 = vmatprep.subr.bf16.mxu0 0
        %1042 = vmatpush1.bf16.xpose.msra.mxu0 0
        %1043 = vmatprep.subr.bf16.mxu0 0
        %1044 = vmatpush1.bf16.xpose.msra.mxu0 0
        %1045 = vmatprep.subr.bf16.mxu0 0
        %1046 = vmatpush1.bf16.xpose.msra.mxu0 0
        %1047 = vmatprep.subr.bf16.mxu0 0
        %1048 = vmatpush1.bf16.xpose.msra.mxu0 0
        %1049 = vmatprep.subr.bf16.mxu0 0
        %1050 = vmatpush1.bf16.xpose.msra.mxu0 0
        %1051 = vmatprep.subr.bf16.mxu0 0
        %1052 = vmatpush1.bf16.xpose.msra.mxu0 0
        %1053 = vmatprep.subr.bf16.mxu0 0
        %1054 = vmatpush1.bf16.xpose.msra.mxu0 0
        %1055 = vmatprep.subr.bf16.mxu0 0
        %1056 = vmatpush1.bf16.xpose.msra.mxu0 %v1039
        %1057 = vmatprep.subr.bf16.mxu0 0
        %1058 = vmatpush2.bf16.xpose.msra.mxu0 0
        %1059 = vmatprep.subr.bf16.mxu0 0
        %1060 = vmatpush2.bf16.xpose.msra.mxu0 0
        %1061 = vmatprep.subr.bf16.mxu0 0
        %1062 = vmatpush2.bf16.xpose.msra.mxu0 0
        %1063 = vmatprep.subr.bf16.mxu0 0
        %1064 = vmatpush2.bf16.xpose.msra.mxu0 0
        %1065 = vmatprep.subr.bf16.mxu0 0
        %1066 = vmatpush2.bf16.xpose.msra.mxu0 0
        %1067 = vmatprep.subr.bf16.mxu0 0
        %1068 = vmatpush2.bf16.xpose.msra.mxu0 0
        %1069 = vmatprep.subr.bf16.mxu0 0
        %1070 = vmatpush2.bf16.xpose.msra.mxu0 0
        %1071 = vmatprep.subr.bf16.mxu0 0
        %1072 = vmatpush2.bf16.xpose.msra.mxu0 0
        %1073 = vmatprep.mubr.bf16.mxu0 0
        %1074 = vmatmul.mubr.bf16.gmra.mxu0 %v1036
        %v1075 = vpop.f32.mrf.mxu0
        %v1076 = vadd.f32 0.0, %v1075
        %v1077 = vpop.f32.mrf.mxu0
        %v1078 = vpop.f32.mrf.mxu0
        %v1079 = vpop.f32.mrf.mxu0
        %1080 = vdwg.mxu0
        %v1081 = vsel %vm764, %v1026, -inf
        %1082 = vmax.xlane.f32.xlu0 %v1081
        %v1083 = vpop.xlane.xlu0 %1082
        %v1084 = vsel %vm764, %v1076, -inf
        %1085 = vmax.xlane.f32.xlu0 %v1084
        %v1086 = vpop.xlane.xlu0 %1085
        %v1087 = vsub.f32 %v1026, %v1083
        %v1088 = vsub.f32 %v1076, %v1086
        %v1089 = vmul.f32 %v1087, 1.442695
        %v1090 = vpow.pop %v1089
        %v1091 = vmul.f32 %v1088, 1.442695
        %v1092 = vpow.pop %v1091
        %v1093 = vsel %vm764, %v1090, 0.0
        %1094 = vadd.xlane.f32.xlu0 %v1093
        %v1095 = vpop.xlane.xlu0 %1094
        %v1096 = vsel %vm764, %v1092, 0.0
        %1097 = vadd.xlane.f32.xlu0 %v1096
        %v1098 = vpop.xlane.xlu0 %1097
        %v1099 = vrcp.pop %v1095
        %v1100 = vrcp.pop %v1098
        %v1101 = vmul.f32 %v1090, %v1099
        %v1102 = vmul.f32 %v1092, %v1100
        %v1103 = vpack.c.bf16 %v1101, %v1101
        %v1104 = vpack.c.bf16 %v1102, %v1102
        %1105 = vrot.lane.b32.xlu0 %v759, 56
        %v1106 = vpop.permute.xlu0 %1105
        %v1108 = vsel %vm764, %v1103, 0
        %v1111 = vsel %vm889, %v1106, 0
        %1113 = vmatprep.subr.bf16.mxu0 0
        %1114 = vmatpush1.bf16.msra.mxu0 0
        %1115 = vmatprep.subr.bf16.mxu0 0
        %1116 = vmatpush1.bf16.msra.mxu0 0
        %1117 = vmatprep.subr.bf16.mxu0 0
        %1118 = vmatpush1.bf16.msra.mxu0 0
        %1119 = vmatprep.subr.bf16.mxu0 0
        %1120 = vmatpush1.bf16.msra.mxu0 0
        %1121 = vmatprep.subr.bf16.mxu0 0
        %1122 = vmatpush1.bf16.msra.mxu0 0
        %1123 = vmatprep.subr.bf16.mxu0 0
        %1124 = vmatpush1.bf16.msra.mxu0 0
        %1125 = vmatprep.subr.bf16.mxu0 0
        %1126 = vmatpush1.bf16.msra.mxu0 0
        %1127 = vmatprep.subr.bf16.mxu0 0
        %1128 = vmatpush1.bf16.msra.mxu0 %v1111
        %1129 = vmatprep.subr.bf16.mxu0 0
        %1130 = vmatpush2.bf16.msra.mxu0 0
        %1131 = vmatprep.subr.bf16.mxu0 0
        %1132 = vmatpush2.bf16.msra.mxu0 0
        %1133 = vmatprep.subr.bf16.mxu0 0
        %1134 = vmatpush2.bf16.msra.mxu0 0
        %1135 = vmatprep.subr.bf16.mxu0 0
        %1136 = vmatpush2.bf16.msra.mxu0 0
        %1137 = vmatprep.subr.bf16.mxu0 0
        %1138 = vmatpush2.bf16.msra.mxu0 0
        %1139 = vmatprep.subr.bf16.mxu0 0
        %1140 = vmatpush2.bf16.msra.mxu0 0
        %1141 = vmatprep.subr.bf16.mxu0 0
        %1142 = vmatpush2.bf16.msra.mxu0 0
        %1143 = vmatprep.subr.bf16.mxu0 0
        %1144 = vmatpush2.bf16.msra.mxu0 0
        %1145 = vmatprep.mubr.bf16.mxu0 0
        %1146 = vmatmul.mubr.bf16.gmra.mxu0 %v1108
        %v1147 = vpop.f32.mrf.mxu0
        %v1148 = vadd.f32 0.0, %v1147
        %v1149 = vpop.f32.mrf.mxu0
        %v1150 = vpop.f32.mrf.mxu0
        %v1151 = vpop.f32.mrf.mxu0
        %1152 = vdwg.mxu0
        %1153 = vrot.lane.b32.xlu0 %v760, 56
        %v1154 = vpop.permute.xlu0 %1153
        %v1156 = vsel %vm764, %v1104, 0
        %v1159 = vsel %vm889, %v1154, 0
        %1161 = vmatprep.subr.bf16.mxu0 0
        %1162 = vmatpush1.bf16.msra.mxu0 0
        %1163 = vmatprep.subr.bf16.mxu0 0
        %1164 = vmatpush1.bf16.msra.mxu0 0
        %1165 = vmatprep.subr.bf16.mxu0 0
        %1166 = vmatpush1.bf16.msra.mxu0 0
        %1167 = vmatprep.subr.bf16.mxu0 0
        %1168 = vmatpush1.bf16.msra.mxu0 0
        %1169 = vmatprep.subr.bf16.mxu0 0
        %1170 = vmatpush1.bf16.msra.mxu0 0
        %1171 = vmatprep.subr.bf16.mxu0 0
        %1172 = vmatpush1.bf16.msra.mxu0 0
        %1173 = vmatprep.subr.bf16.mxu0 0
        %1174 = vmatpush1.bf16.msra.mxu0 0
        %1175 = vmatprep.subr.bf16.mxu0 0
        %1176 = vmatpush1.bf16.msra.mxu0 %v1159
        %1177 = vmatprep.subr.bf16.mxu0 0
        %1178 = vmatpush2.bf16.msra.mxu0 0
        %1179 = vmatprep.subr.bf16.mxu0 0
        %1180 = vmatpush2.bf16.msra.mxu0 0
        %1181 = vmatprep.subr.bf16.mxu0 0
        %1182 = vmatpush2.bf16.msra.mxu0 0
        %1183 = vmatprep.subr.bf16.mxu0 0
        %1184 = vmatpush2.bf16.msra.mxu0 0
        %1185 = vmatprep.subr.bf16.mxu0 0
        %1186 = vmatpush2.bf16.msra.mxu0 0
        %1187 = vmatprep.subr.bf16.mxu0 0
        %1188 = vmatpush2.bf16.msra.mxu0 0
        %1189 = vmatprep.subr.bf16.mxu0 0
        %1190 = vmatpush2.bf16.msra.mxu0 0
        %1191 = vmatprep.subr.bf16.mxu0 0
        %1192 = vmatpush2.bf16.msra.mxu0 0
        %1193 = vmatprep.mubr.bf16.mxu0 0
        %1194 = vmatmul.mubr.bf16.gmra.mxu0 %v1156
        %v1195 = vpop.f32.mrf.mxu0
        %v1196 = vadd.f32 0.0, %v1195
        %v1197 = vpop.f32.mrf.mxu0
        %v1198 = vpop.f32.mrf.mxu0
        %v1199 = vpop.f32.mrf.mxu0
        %1200 = vdwg.mxu0
        %1201 = vrot.lane.b32.xlu0 %v759, 112
        %v1202 = vpop.permute.xlu0 %1201
        %1203 = vrot.lane.b32.xlu0 %v759, 80
        %v1204 = vpop.permute.xlu0 %1203
        %v1206 = vsel %vm764, %v1202, 0
        %v1209 = vsel %vm764, %v1204, 0
        %1211 = vmatprep.subr.bf16.mxu0 0
        %1212 = vmatpush1.bf16.xpose.msra.mxu0 0
        %1213 = vmatprep.subr.bf16.mxu0 0
        %1214 = vmatpush1.bf16.xpose.msra.mxu0 0
        %1215 = vmatprep.subr.bf16.mxu0 0
        %1216 = vmatpush1.bf16.xpose.msra.mxu0 0
        %1217 = vmatprep.subr.bf16.mxu0 0
        %1218 = vmatpush1.bf16.xpose.msra.mxu0 0
        %1219 = vmatprep.subr.bf16.mxu0 0
        %1220 = vmatpush1.bf16.xpose.msra.mxu0 0
        %1221 = vmatprep.subr.bf16.mxu0 0
        %1222 = vmatpush1.bf16.xpose.msra.mxu0 0
        %1223 = vmatprep.subr.bf16.mxu0 0
        %1224 = vmatpush1.bf16.xpose.msra.mxu0 0
        %1225 = vmatprep.subr.bf16.mxu0 0
        %1226 = vmatpush1.bf16.xpose.msra.mxu0 %v1209
        %1227 = vmatprep.subr.bf16.mxu0 0
        %1228 = vmatpush2.bf16.xpose.msra.mxu0 0
        %1229 = vmatprep.subr.bf16.mxu0 0
        %1230 = vmatpush2.bf16.xpose.msra.mxu0 0
        %1231 = vmatprep.subr.bf16.mxu0 0
        %1232 = vmatpush2.bf16.xpose.msra.mxu0 0
        %1233 = vmatprep.subr.bf16.mxu0 0
        %1234 = vmatpush2.bf16.xpose.msra.mxu0 0
        %1235 = vmatprep.subr.bf16.mxu0 0
        %1236 = vmatpush2.bf16.xpose.msra.mxu0 0
        %1237 = vmatprep.subr.bf16.mxu0 0
        %1238 = vmatpush2.bf16.xpose.msra.mxu0 0
        %1239 = vmatprep.subr.bf16.mxu0 0
        %1240 = vmatpush2.bf16.xpose.msra.mxu0 0
        %1241 = vmatprep.subr.bf16.mxu0 0
        %1242 = vmatpush2.bf16.xpose.msra.mxu0 0
        %1243 = vmatprep.mubr.bf16.mxu0 0
        %1244 = vmatmul.mubr.bf16.gmra.mxu0 %v1206
        %v1245 = vpop.f32.mrf.mxu0
        %v1246 = vadd.f32 0.0, %v1245
        %v1247 = vpop.f32.mrf.mxu0
        %v1248 = vpop.f32.mrf.mxu0
        %v1249 = vpop.f32.mrf.mxu0
        %1250 = vdwg.mxu0
        %1251 = vrot.lane.b32.xlu0 %v760, 112
        %v1252 = vpop.permute.xlu0 %1251
        %1253 = vrot.lane.b32.xlu0 %v760, 80
        %v1254 = vpop.permute.xlu0 %1253
        %v1256 = vsel %vm764, %v1252, 0
        %v1259 = vsel %vm764, %v1254, 0
        %1261 = vmatprep.subr.bf16.mxu0 0
        %1262 = vmatpush1.bf16.xpose.msra.mxu0 0
        %1263 = vmatprep.subr.bf16.mxu0 0
        %1264 = vmatpush1.bf16.xpose.msra.mxu0 0
        %1265 = vmatprep.subr.bf16.mxu0 0
        %1266 = vmatpush1.bf16.xpose.msra.mxu0 0
        %1267 = vmatprep.subr.bf16.mxu0 0
        %1268 = vmatpush1.bf16.xpose.msra.mxu0 0
        %1269 = vmatprep.subr.bf16.mxu0 0
        %1270 = vmatpush1.bf16.xpose.msra.mxu0 0
        %1271 = vmatprep.subr.bf16.mxu0 0
        %1272 = vmatpush1.bf16.xpose.msra.mxu0 0
        %1273 = vmatprep.subr.bf16.mxu0 0
        %1274 = vmatpush1.bf16.xpose.msra.mxu0 0
        %1275 = vmatprep.subr.bf16.mxu0 0
        %1276 = vmatpush1.bf16.xpose.msra.mxu0 %v1259
        %1277 = vmatprep.subr.bf16.mxu0 0
        %1278 = vmatpush2.bf16.xpose.msra.mxu0 0
        %1279 = vmatprep.subr.bf16.mxu0 0
        %1280 = vmatpush2.bf16.xpose.msra.mxu0 0
        %1281 = vmatprep.subr.bf16.mxu0 0
        %1282 = vmatpush2.bf16.xpose.msra.mxu0 0
        %1283 = vmatprep.subr.bf16.mxu0 0
        %1284 = vmatpush2.bf16.xpose.msra.mxu0 0
        %1285 = vmatprep.subr.bf16.mxu0 0
        %1286 = vmatpush2.bf16.xpose.msra.mxu0 0
        %1287 = vmatprep.subr.bf16.mxu0 0
        %1288 = vmatpush2.bf16.xpose.msra.mxu0 0
        %1289 = vmatprep.subr.bf16.mxu0 0
        %1290 = vmatpush2.bf16.xpose.msra.mxu0 0
        %1291 = vmatprep.subr.bf16.mxu0 0
        %1292 = vmatpush2.bf16.xpose.msra.mxu0 0
        %1293 = vmatprep.mubr.bf16.mxu0 0
        %1294 = vmatmul.mubr.bf16.gmra.mxu0 %v1256
        %v1295 = vpop.f32.mrf.mxu0
        %v1296 = vadd.f32 0.0, %v1295
        %v1297 = vpop.f32.mrf.mxu0
        %v1298 = vpop.f32.mrf.mxu0
        %v1299 = vpop.f32.mrf.mxu0
        %1300 = vdwg.mxu0
        %v1301 = vsel %vm764, %v1246, -inf
        %1302 = vmax.xlane.f32.xlu0 %v1301
        %v1303 = vpop.xlane.xlu0 %1302
        %v1304 = vsel %vm764, %v1296, -inf
        %1305 = vmax.xlane.f32.xlu0 %v1304
        %v1306 = vpop.xlane.xlu0 %1305
        %v1307 = vsub.f32 %v1246, %v1303
        %v1308 = vsub.f32 %v1296, %v1306
        %v1309 = vmul.f32 %v1307, 1.442695
        %v1310 = vpow.pop %v1309
        %v1311 = vmul.f32 %v1308, 1.442695
        %v1312 = vpow.pop %v1311
        %v1313 = vsel %vm764, %v1310, 0.0
        %1314 = vadd.xlane.f32.xlu0 %v1313
        %v1315 = vpop.xlane.xlu0 %1314
        %v1316 = vsel %vm764, %v1312, 0.0
        %1317 = vadd.xlane.f32.xlu0 %v1316
        %v1318 = vpop.xlane.xlu0 %1317
        %v1319 = vrcp.pop %v1315
        %v1320 = vrcp.pop %v1318
        %v1321 = vmul.f32 %v1310, %v1319
        %v1322 = vmul.f32 %v1312, %v1320
        %v1323 = vpack.c.bf16 %v1321, %v1321
        %v1324 = vpack.c.bf16 %v1322, %v1322
        %1325 = vrot.lane.b32.xlu0 %v759, 48
        %v1326 = vpop.permute.xlu0 %1325
        %v1328 = vsel %vm764, %v1323, 0
        %v1331 = vsel %vm889, %v1326, 0
        %1333 = vmatprep.subr.bf16.mxu0 0
        %1334 = vmatpush1.bf16.msra.mxu0 0
        %1335 = vmatprep.subr.bf16.mxu0 0
        %1336 = vmatpush1.bf16.msra.mxu0 0
        %1337 = vmatprep.subr.bf16.mxu0 0
        %1338 = vmatpush1.bf16.msra.mxu0 0
        %1339 = vmatprep.subr.bf16.mxu0 0
        %1340 = vmatpush1.bf16.msra.mxu0 0
        %1341 = vmatprep.subr.bf16.mxu0 0
        %1342 = vmatpush1.bf16.msra.mxu0 0
        %1343 = vmatprep.subr.bf16.mxu0 0
        %1344 = vmatpush1.bf16.msra.mxu0 0
        %1345 = vmatprep.subr.bf16.mxu0 0
        %1346 = vmatpush1.bf16.msra.mxu0 0
        %1347 = vmatprep.subr.bf16.mxu0 0
        %1348 = vmatpush1.bf16.msra.mxu0 %v1331
        %1349 = vmatprep.subr.bf16.mxu0 0
        %1350 = vmatpush2.bf16.msra.mxu0 0
        %1351 = vmatprep.subr.bf16.mxu0 0
        %1352 = vmatpush2.bf16.msra.mxu0 0
        %1353 = vmatprep.subr.bf16.mxu0 0
        %1354 = vmatpush2.bf16.msra.mxu0 0
        %1355 = vmatprep.subr.bf16.mxu0 0
        %1356 = vmatpush2.bf16.msra.mxu0 0
        %1357 = vmatprep.subr.bf16.mxu0 0
        %1358 = vmatpush2.bf16.msra.mxu0 0
        %1359 = vmatprep.subr.bf16.mxu0 0
        %1360 = vmatpush2.bf16.msra.mxu0 0
        %1361 = vmatprep.subr.bf16.mxu0 0
        %1362 = vmatpush2.bf16.msra.mxu0 0
        %1363 = vmatprep.subr.bf16.mxu0 0
        %1364 = vmatpush2.bf16.msra.mxu0 0
        %1365 = vmatprep.mubr.bf16.mxu0 0
        %1366 = vmatmul.mubr.bf16.gmra.mxu0 %v1328
        %v1367 = vpop.f32.mrf.mxu0
        %v1368 = vadd.f32 0.0, %v1367
        %v1369 = vpop.f32.mrf.mxu0
        %v1370 = vpop.f32.mrf.mxu0
        %v1371 = vpop.f32.mrf.mxu0
        %1372 = vdwg.mxu0
        %1373 = vrot.lane.b32.xlu0 %v760, 48
        %v1374 = vpop.permute.xlu0 %1373
        %v1376 = vsel %vm764, %v1324, 0
        %v1379 = vsel %vm889, %v1374, 0
        %1381 = vmatprep.subr.bf16.mxu0 0
        %1382 = vmatpush1.bf16.msra.mxu0 0
        %1383 = vmatprep.subr.bf16.mxu0 0
        %1384 = vmatpush1.bf16.msra.mxu0 0
        %1385 = vmatprep.subr.bf16.mxu0 0
        %1386 = vmatpush1.bf16.msra.mxu0 0
        %1387 = vmatprep.subr.bf16.mxu0 0
        %1388 = vmatpush1.bf16.msra.mxu0 0
        %1389 = vmatprep.subr.bf16.mxu0 0
        %1390 = vmatpush1.bf16.msra.mxu0 0
        %1391 = vmatprep.subr.bf16.mxu0 0
        %1392 = vmatpush1.bf16.msra.mxu0 0
        %1393 = vmatprep.subr.bf16.mxu0 0
        %1394 = vmatpush1.bf16.msra.mxu0 0
        %1395 = vmatprep.subr.bf16.mxu0 0
        %1396 = vmatpush1.bf16.msra.mxu0 %v1379
        %1397 = vmatprep.subr.bf16.mxu0 0
        %1398 = vmatpush2.bf16.msra.mxu0 0
        %1399 = vmatprep.subr.bf16.mxu0 0
        %1400 = vmatpush2.bf16.msra.mxu0 0
        %1401 = vmatprep.subr.bf16.mxu0 0
        %1402 = vmatpush2.bf16.msra.mxu0 0
        %1403 = vmatprep.subr.bf16.mxu0 0
        %1404 = vmatpush2.bf16.msra.mxu0 0
        %1405 = vmatprep.subr.bf16.mxu0 0
        %1406 = vmatpush2.bf16.msra.mxu0 0
        %1407 = vmatprep.subr.bf16.mxu0 0
        %1408 = vmatpush2.bf16.msra.mxu0 0
        %1409 = vmatprep.subr.bf16.mxu0 0
        %1410 = vmatpush2.bf16.msra.mxu0 0
        %1411 = vmatprep.subr.bf16.mxu0 0
        %1412 = vmatpush2.bf16.msra.mxu0 0
        %1413 = vmatprep.mubr.bf16.mxu0 0
        %1414 = vmatmul.mubr.bf16.gmra.mxu0 %v1376
        %v1415 = vpop.f32.mrf.mxu0
        %v1416 = vadd.f32 0.0, %v1415
        %v1417 = vpop.f32.mrf.mxu0
        %v1418 = vpop.f32.mrf.mxu0
        %v1419 = vpop.f32.mrf.mxu0
        %1420 = vdwg.mxu0
        %1421 = vrot.lane.b32.xlu0 %v759, 104
        %v1422 = vpop.permute.xlu0 %1421
        %1423 = vrot.lane.b32.xlu0 %v759, 72
        %v1424 = vpop.permute.xlu0 %1423
        %v1426 = vsel %vm764, %v1422, 0
        %v1429 = vsel %vm764, %v1424, 0
        %1431 = vmatprep.subr.bf16.mxu0 0
        %1432 = vmatpush1.bf16.xpose.msra.mxu0 0
        %1433 = vmatprep.subr.bf16.mxu0 0
        %1434 = vmatpush1.bf16.xpose.msra.mxu0 0
        %1435 = vmatprep.subr.bf16.mxu0 0
        %1436 = vmatpush1.bf16.xpose.msra.mxu0 0
        %1437 = vmatprep.subr.bf16.mxu0 0
        %1438 = vmatpush1.bf16.xpose.msra.mxu0 0
        %1439 = vmatprep.subr.bf16.mxu0 0
        %1440 = vmatpush1.bf16.xpose.msra.mxu0 0
        %1441 = vmatprep.subr.bf16.mxu0 0
        %1442 = vmatpush1.bf16.xpose.msra.mxu0 0
        %1443 = vmatprep.subr.bf16.mxu0 0
        %1444 = vmatpush1.bf16.xpose.msra.mxu0 0
        %1445 = vmatprep.subr.bf16.mxu0 0
        %1446 = vmatpush1.bf16.xpose.msra.mxu0 %v1429
        %1447 = vmatprep.subr.bf16.mxu0 0
        %1448 = vmatpush2.bf16.xpose.msra.mxu0 0
        %1449 = vmatprep.subr.bf16.mxu0 0
        %1450 = vmatpush2.bf16.xpose.msra.mxu0 0
        %1451 = vmatprep.subr.bf16.mxu0 0
        %1452 = vmatpush2.bf16.xpose.msra.mxu0 0
        %1453 = vmatprep.subr.bf16.mxu0 0
        %1454 = vmatpush2.bf16.xpose.msra.mxu0 0
        %1455 = vmatprep.subr.bf16.mxu0 0
        %1456 = vmatpush2.bf16.xpose.msra.mxu0 0
        %1457 = vmatprep.subr.bf16.mxu0 0
        %1458 = vmatpush2.bf16.xpose.msra.mxu0 0
        %1459 = vmatprep.subr.bf16.mxu0 0
        %1460 = vmatpush2.bf16.xpose.msra.mxu0 0
        %1461 = vmatprep.subr.bf16.mxu0 0
        %1462 = vmatpush2.bf16.xpose.msra.mxu0 0
        %1463 = vmatprep.mubr.bf16.mxu0 0
        %1464 = vmatmul.mubr.bf16.gmra.mxu0 %v1426
        %v1465 = vpop.f32.mrf.mxu0
        %v1466 = vadd.f32 0.0, %v1465
        %v1467 = vpop.f32.mrf.mxu0
        %v1468 = vpop.f32.mrf.mxu0
        %v1469 = vpop.f32.mrf.mxu0
        %1470 = vdwg.mxu0
        %1471 = vrot.lane.b32.xlu0 %v760, 104
        %v1472 = vpop.permute.xlu0 %1471
        %1473 = vrot.lane.b32.xlu0 %v760, 72
        %v1474 = vpop.permute.xlu0 %1473
        %v1476 = vsel %vm764, %v1472, 0
        %v1479 = vsel %vm764, %v1474, 0
        %1481 = vmatprep.subr.bf16.mxu0 0
        %1482 = vmatpush1.bf16.xpose.msra.mxu0 0
        %1483 = vmatprep.subr.bf16.mxu0 0
        %1484 = vmatpush1.bf16.xpose.msra.mxu0 0
        %1485 = vmatprep.subr.bf16.mxu0 0
        %1486 = vmatpush1.bf16.xpose.msra.mxu0 0
        %1487 = vmatprep.subr.bf16.mxu0 0
        %1488 = vmatpush1.bf16.xpose.msra.mxu0 0
        %1489 = vmatprep.subr.bf16.mxu0 0
        %1490 = vmatpush1.bf16.xpose.msra.mxu0 0
        %1491 = vmatprep.subr.bf16.mxu0 0
        %1492 = vmatpush1.bf16.xpose.msra.mxu0 0
        %1493 = vmatprep.subr.bf16.mxu0 0
        %1494 = vmatpush1.bf16.xpose.msra.mxu0 0
        %1495 = vmatprep.subr.bf16.mxu0 0
        %1496 = vmatpush1.bf16.xpose.msra.mxu0 %v1479
        %1497 = vmatprep.subr.bf16.mxu0 0
        %1498 = vmatpush2.bf16.xpose.msra.mxu0 0
        %1499 = vmatprep.subr.bf16.mxu0 0
        %1500 = vmatpush2.bf16.xpose.msra.mxu0 0
        %1501 = vmatprep.subr.bf16.mxu0 0
        %1502 = vmatpush2.bf16.xpose.msra.mxu0 0
        %1503 = vmatprep.subr.bf16.mxu0 0
        %1504 = vmatpush2.bf16.xpose.msra.mxu0 0
        %1505 = vmatprep.subr.bf16.mxu0 0
        %1506 = vmatpush2.bf16.xpose.msra.mxu0 0
        %1507 = vmatprep.subr.bf16.mxu0 0
        %1508 = vmatpush2.bf16.xpose.msra.mxu0 0
        %1509 = vmatprep.subr.bf16.mxu0 0
        %1510 = vmatpush2.bf16.xpose.msra.mxu0 0
        %1511 = vmatprep.subr.bf16.mxu0 0
        %1512 = vmatpush2.bf16.xpose.msra.mxu0 0
        %1513 = vmatprep.mubr.bf16.mxu0 0
        %1514 = vmatmul.mubr.bf16.gmra.mxu0 %v1476
        %v1515 = vpop.f32.mrf.mxu0
        %v1516 = vadd.f32 0.0, %v1515
        %v1517 = vpop.f32.mrf.mxu0
        %v1518 = vpop.f32.mrf.mxu0
        %v1519 = vpop.f32.mrf.mxu0
        %1520 = vdwg.mxu0
        %v1521 = vsel %vm764, %v1466, -inf
        %1522 = vmax.xlane.f32.xlu0 %v1521
        %v1523 = vpop.xlane.xlu0 %1522
        %v1524 = vsel %vm764, %v1516, -inf
        %1525 = vmax.xlane.f32.xlu0 %v1524
        %v1526 = vpop.xlane.xlu0 %1525
        %v1527 = vsub.f32 %v1466, %v1523
        %v1528 = vsub.f32 %v1516, %v1526
        %v1529 = vmul.f32 %v1527, 1.442695
        %v1530 = vpow.pop %v1529
        %v1531 = vmul.f32 %v1528, 1.442695
        %v1532 = vpow.pop %v1531
        %v1533 = vsel %vm764, %v1530, 0.0
        %1534 = vadd.xlane.f32.xlu0 %v1533
        %v1535 = vpop.xlane.xlu0 %1534
        %v1536 = vsel %vm764, %v1532, 0.0
        %1537 = vadd.xlane.f32.xlu0 %v1536
        %v1538 = vpop.xlane.xlu0 %1537
        %v1539 = vrcp.pop %v1535
        %v1540 = vrcp.pop %v1538
        %v1541 = vmul.f32 %v1530, %v1539
        %v1542 = vmul.f32 %v1532, %v1540
        %v1543 = vpack.c.bf16 %v1541, %v1541
        %v1544 = vpack.c.bf16 %v1542, %v1542
        %1545 = vrot.lane.b32.xlu0 %v759, 40
        %v1546 = vpop.permute.xlu0 %1545
        %v1548 = vsel %vm764, %v1543, 0
        %v1551 = vsel %vm889, %v1546, 0
        %1553 = vmatprep.subr.bf16.mxu0 0
        %1554 = vmatpush1.bf16.msra.mxu0 0
        %1555 = vmatprep.subr.bf16.mxu0 0
        %1556 = vmatpush1.bf16.msra.mxu0 0
        %1557 = vmatprep.subr.bf16.mxu0 0
        %1558 = vmatpush1.bf16.msra.mxu0 0
        %1559 = vmatprep.subr.bf16.mxu0 0
        %1560 = vmatpush1.bf16.msra.mxu0 0
        %1561 = vmatprep.subr.bf16.mxu0 0
        %1562 = vmatpush1.bf16.msra.mxu0 0
        %1563 = vmatprep.subr.bf16.mxu0 0
        %1564 = vmatpush1.bf16.msra.mxu0 0
        %1565 = vmatprep.subr.bf16.mxu0 0
        %1566 = vmatpush1.bf16.msra.mxu0 0
        %1567 = vmatprep.subr.bf16.mxu0 0
        %1568 = vmatpush1.bf16.msra.mxu0 %v1551
        %1569 = vmatprep.subr.bf16.mxu0 0
        %1570 = vmatpush2.bf16.msra.mxu0 0
        %1571 = vmatprep.subr.bf16.mxu0 0
        %1572 = vmatpush2.bf16.msra.mxu0 0
        %1573 = vmatprep.subr.bf16.mxu0 0
        %1574 = vmatpush2.bf16.msra.mxu0 0
        %1575 = vmatprep.subr.bf16.mxu0 0
        %1576 = vmatpush2.bf16.msra.mxu0 0
        %1577 = vmatprep.subr.bf16.mxu0 0
        %1578 = vmatpush2.bf16.msra.mxu0 0
        %1579 = vmatprep.subr.bf16.mxu0 0
        %1580 = vmatpush2.bf16.msra.mxu0 0
        %1581 = vmatprep.subr.bf16.mxu0 0
        %1582 = vmatpush2.bf16.msra.mxu0 0
        %1583 = vmatprep.subr.bf16.mxu0 0
        %1584 = vmatpush2.bf16.msra.mxu0 0
        %1585 = vmatprep.mubr.bf16.mxu0 0
        %1586 = vmatmul.mubr.bf16.gmra.mxu0 %v1548
        %v1587 = vpop.f32.mrf.mxu0
        %v1588 = vadd.f32 0.0, %v1587
        %v1589 = vpop.f32.mrf.mxu0
        %v1590 = vpop.f32.mrf.mxu0
        %v1591 = vpop.f32.mrf.mxu0
        %1592 = vdwg.mxu0
        %1593 = vrot.lane.b32.xlu0 %v760, 40
        %v1594 = vpop.permute.xlu0 %1593
        %v1596 = vsel %vm764, %v1544, 0
        %v1599 = vsel %vm889, %v1594, 0
        %1601 = vmatprep.subr.bf16.mxu0 0
        %1602 = vmatpush1.bf16.msra.mxu0 0
        %1603 = vmatprep.subr.bf16.mxu0 0
        %1604 = vmatpush1.bf16.msra.mxu0 0
        %1605 = vmatprep.subr.bf16.mxu0 0
        %1606 = vmatpush1.bf16.msra.mxu0 0
        %1607 = vmatprep.subr.bf16.mxu0 0
        %1608 = vmatpush1.bf16.msra.mxu0 0
        %1609 = vmatprep.subr.bf16.mxu0 0
        %1610 = vmatpush1.bf16.msra.mxu0 0
        %1611 = vmatprep.subr.bf16.mxu0 0
        %1612 = vmatpush1.bf16.msra.mxu0 0
        %1613 = vmatprep.subr.bf16.mxu0 0
        %1614 = vmatpush1.bf16.msra.mxu0 0
        %1615 = vmatprep.subr.bf16.mxu0 0
        %1616 = vmatpush1.bf16.msra.mxu0 %v1599
        %1617 = vmatprep.subr.bf16.mxu0 0
        %1618 = vmatpush2.bf16.msra.mxu0 0
        %1619 = vmatprep.subr.bf16.mxu0 0
        %1620 = vmatpush2.bf16.msra.mxu0 0
        %1621 = vmatprep.subr.bf16.mxu0 0
        %1622 = vmatpush2.bf16.msra.mxu0 0
        %1623 = vmatprep.subr.bf16.mxu0 0
        %1624 = vmatpush2.bf16.msra.mxu0 0
        %1625 = vmatprep.subr.bf16.mxu0 0
        %1626 = vmatpush2.bf16.msra.mxu0 0
        %1627 = vmatprep.subr.bf16.mxu0 0
        %1628 = vmatpush2.bf16.msra.mxu0 0
        %1629 = vmatprep.subr.bf16.mxu0 0
        %1630 = vmatpush2.bf16.msra.mxu0 0
        %1631 = vmatprep.subr.bf16.mxu0 0
        %1632 = vmatpush2.bf16.msra.mxu0 0
        %1633 = vmatprep.mubr.bf16.mxu0 0
        %1634 = vmatmul.mubr.bf16.gmra.mxu0 %v1596
        %v1635 = vpop.f32.mrf.mxu0
        %v1636 = vadd.f32 0.0, %v1635
        %v1637 = vpop.f32.mrf.mxu0
        %v1638 = vpop.f32.mrf.mxu0
        %v1639 = vpop.f32.mrf.mxu0
        %1640 = vdwg.mxu0
        %1643 = vrot.lane.b32.xlu0 %v1148, 8
        %v1644 = vpop.permute.xlu0 %1643
        %1645 = vrot.lane.b32.xlu0 %v1196, 8
        %v1646 = vpop.permute.xlu0 %1645
        %1651 = vrot.lane.b32.xlu0 %v1368, 16
        %v1652 = vpop.permute.xlu0 %1651
        %1653 = vrot.lane.b32.xlu0 %v1416, 16
        %v1654 = vpop.permute.xlu0 %1653
        %1659 = vrot.lane.b32.xlu0 %v1588, 24
        %v1660 = vpop.permute.xlu0 %1659
        %1661 = vrot.lane.b32.xlu0 %v1636, 24
        %v1662 = vpop.permute.xlu0 %1661
        %v1665 = vsel %vm764, %v928, %v1644
        %v1666 = vsel %vm764, %v976, %v1646
        %vm1667 = vcmask 130048
        %v1668 = vsel %vm1667, %v1665, %v1652
        %v1669 = vsel %vm1667, %v1666, %v1654
        %vm1670 = vcmask 195584
        %v1671 = vsel %vm1670, %v1668, %v1660
        %v1672 = vsel %vm1670, %v1669, %v1662
        %v1673 = vpack.c.bf16 %v1672, %v1671
        %v1674 = vld [vmem:[%s596] sm:$0xf]
        %v1675 = vld [vmem:[%s596 + $0x4] sm:$0xf]
        %v1676 = vld [vmem:[%s596 + $0x8] sm:$0xf]
        %v1677 = vld [vmem:[%s596 + $0xc] sm:$0xf]
        %v1678 = vlaneseq
        %v1679 = vshrl.u32 %v1678, 7
        %v1680 = vsub.s32 0, %v1679
        %v1681 = vrot.slane %v689, %v1680
        %v1686 = vunpack.c.l.b16 %v1674
        %v1687 = vunpack.c.l.b16 %v1675
        %v1688 = vunpack.c.l.b16 %v1676
        %v1689 = vunpack.c.l.b16 %v1677
        %v1690 = vpack.c.b16 %v1687, %v1686
        %v1691 = vpack.c.b16 %v1689, %v1688
        %v1695 = vsel %vm714, %v1673, 0
        %1697 = vmatprep.subr.bf16.mxu0 0
        %1698 = vmatpush1.bf16.msra.mxu0 0
        %1699 = vmatprep.subr.bf16.mxu0 0
        %1700 = vmatpush1.bf16.msra.mxu0 0
        %1701 = vmatprep.subr.bf16.mxu0 0
        %1702 = vmatpush1.bf16.msra.mxu0 0
        %1703 = vmatprep.subr.bf16.mxu0 0
        %1704 = vmatpush1.bf16.msra.mxu0 0
        %1705 = vmatprep.subr.bf16.mxu0 0
        %1706 = vmatpush1.bf16.msra.mxu0 0
        %1707 = vmatprep.subr.bf16.mxu0 0
        %1708 = vmatpush1.bf16.msra.mxu0 0
        %1709 = vmatprep.subr.bf16.mxu0 0
        %1710 = vmatpush1.bf16.msra.mxu0 %v1691
        %1711 = vmatprep.subr.bf16.mxu0 0
        %1712 = vmatpush1.bf16.msra.mxu0 %v1690
        %1713 = vmatprep.subr.bf16.mxu0 0
        %1714 = vmatpush2.bf16.msra.mxu0 0
        %1715 = vmatprep.subr.bf16.mxu0 0
        %1716 = vmatpush2.bf16.msra.mxu0 0
        %1717 = vmatprep.subr.bf16.mxu0 0
        %1718 = vmatpush2.bf16.msra.mxu0 0
        %1719 = vmatprep.subr.bf16.mxu0 0
        %1720 = vmatpush2.bf16.msra.mxu0 0
        %1721 = vmatprep.subr.bf16.mxu0 0
        %1722 = vmatpush2.bf16.msra.mxu0 0
        %1723 = vmatprep.subr.bf16.mxu0 0
        %1724 = vmatpush2.bf16.msra.mxu0 0
        %1725 = vmatprep.subr.bf16.mxu0 0
        %1726 = vmatpush2.bf16.msra.mxu0 0
        %1727 = vmatprep.subr.bf16.mxu0 0
        %1728 = vmatpush2.bf16.msra.mxu0 0
        %1729 = vmatprep.mubr.bf16.mxu0 0
        %1730 = vmatmul.mubr.bf16.gmra.mxu0 %v1695
        %v1731 = vpop.f32.mrf.mxu0
        %v1732 = vadd.f32 %v1681, %v1731
        %v1733 = vpop.f32.mrf.mxu0
        %v1734 = vpop.f32.mrf.mxu0
        %v1735 = vadd.f32 %v1681, %v1734
        %v1736 = vpop.f32.mrf.mxu0
        %1737 = vdwg.mxu0
        %v1738 = vadd.f32 %v687, %v1732
        %v1739 = vadd.f32 %v688, %v1735
        %v1740 = vsel %vm714, %v1738, 0.0
        %1741 = vadd.xlane.f32.xlu0 %v1740
        %v1742 = vpop.xlane.xlu0 %1741
        %v1743 = vsel %vm714, %v1739, 0.0
        %1744 = vadd.xlane.f32.xlu0 %v1743
        %v1745 = vpop.xlane.xlu0 %1744
        %v1746 = vrcp.pop 32.0
        %v1747 = vmul.f32 %v1742, %v1746
        %v1748 = vmul.f32 %v1745, %v1746
        %v1749 = vsub.f32 %v1738, %v1747
        %v1750 = vsub.f32 %v1739, %v1748
        %v1751 = vmul.f32 %v1749, %v1749
        %v1752 = vmul.f32 %v1750, %v1750
        %v1753 = vsel %vm714, %v1751, 0.0
        %1754 = vadd.xlane.f32.xlu0 %v1753
        %v1755 = vpop.xlane.xlu0 %1754
        %v1756 = vsel %vm714, %v1752, 0.0
        %1757 = vadd.xlane.f32.xlu0 %v1756
        %v1758 = vpop.xlane.xlu0 %1757
        %v1759 = vmul.f32 %v1755, %v1746
        %v1760 = vmul.f32 %v1758, %v1746
        %v1761 = vadd.f32 %v1759, 1e-05
        %v1762 = vadd.f32 %v1760, 1e-05
        %v1763 = vrsqrt.pop %v1761
        %v1764 = vrsqrt.pop %v1762
        %v1765 = vmul.f32 %v1749, %v1763
        %v1766 = vmul.f32 %v1750, %v1764
        %v1767 = vlaneseq
        %v1768 = vshrl.u32 %v1767, 7
        %v1769 = vsub.s32 2, %v1768
        %v1770 = vrot.slane %v689, %v1769
        %v1771 = vmul.f32 %v1765, %v1770
        %v1772 = vmul.f32 %v1766, %v1770
        %v1773 = vlaneseq
        %v1774 = vshrl.u32 %v1773, 7
        %v1775 = vsub.s32 3, %v1774
        %v1776 = vrot.slane %v689, %v1775
        %v1777 = vadd.f32 %v1771, %v1776
        %v1778 = vadd.f32 %v1772, %v1776
        %v1779 = vpack.c.bf16 %v1778, %v1777
        %v1780 = vld [vmem:[%s601] sm:$0xf]
        %v1781 = vld [vmem:[%s601 + $0x4] sm:$0xf]
        %v1782 = vld [vmem:[%s601 + $0x8] sm:$0xf]
        %v1783 = vld [vmem:[%s601 + $0xc] sm:$0xf]
        %v1784 = vld [vmem:[%s604] sm:$0x1]
        %v1786 = vlaneseq
        %v1787 = vshrl.u32 %v1786, 7
        %v1788 = vsub.s32 0, %v1787
        %v1789 = vrot.slane %v1784, %v1788
        %v1795 = vunpack.c.l.b16 %v1780
        %v1796 = vunpack.c.l.b16 %v1781
        %v1797 = vunpack.c.l.b16 %v1782
        %v1798 = vunpack.c.l.b16 %v1783
        %v1799 = vpack.c.b16 %v1796, %v1795
        %v1800 = vpack.c.b16 %v1798, %v1797
        %v1804 = vsel %vm714, %v1779, 0
        %1806 = vmatprep.subr.bf16.mxu0 0
        %1807 = vmatpush1.bf16.msra.mxu0 0
        %1808 = vmatprep.subr.bf16.mxu0 0
        %1809 = vmatpush1.bf16.msra.mxu0 0
        %1810 = vmatprep.subr.bf16.mxu0 0
        %1811 = vmatpush1.bf16.msra.mxu0 0
        %1812 = vmatprep.subr.bf16.mxu0 0
        %1813 = vmatpush1.bf16.msra.mxu0 0
        %1814 = vmatprep.subr.bf16.mxu0 0
        %1815 = vmatpush1.bf16.msra.mxu0 0
        %1816 = vmatprep.subr.bf16.mxu0 0
        %1817 = vmatpush1.bf16.msra.mxu0 0
        %1818 = vmatprep.subr.bf16.mxu0 0
        %1819 = vmatpush1.bf16.msra.mxu0 %v1800
        %1820 = vmatprep.subr.bf16.mxu0 0
        %1821 = vmatpush1.bf16.msra.mxu0 %v1799
        %1822 = vmatprep.subr.bf16.mxu0 0
        %1823 = vmatpush2.bf16.msra.mxu0 0
        %1824 = vmatprep.subr.bf16.mxu0 0
        %1825 = vmatpush2.bf16.msra.mxu0 0
        %1826 = vmatprep.subr.bf16.mxu0 0
        %1827 = vmatpush2.bf16.msra.mxu0 0
        %1828 = vmatprep.subr.bf16.mxu0 0
        %1829 = vmatpush2.bf16.msra.mxu0 0
        %1830 = vmatprep.subr.bf16.mxu0 0
        %1831 = vmatpush2.bf16.msra.mxu0 0
        %1832 = vmatprep.subr.bf16.mxu0 0
        %1833 = vmatpush2.bf16.msra.mxu0 0
        %1834 = vmatprep.subr.bf16.mxu0 0
        %1835 = vmatpush2.bf16.msra.mxu0 0
        %1836 = vmatprep.subr.bf16.mxu0 0
        %1837 = vmatpush2.bf16.msra.mxu0 0
        %1838 = vmatprep.mubr.bf16.mxu0 0
        %1839 = vmatmul.mubr.bf16.gmra.mxu0 %v1804
        %v1840 = vpop.f32.mrf.mxu0
        %v1841 = vadd.f32 %v1789, %v1840
        %v1842 = vpop.f32.mrf.mxu0
        %v1843 = vpop.f32.mrf.mxu0
        %v1844 = vadd.f32 %v1789, %v1843
        %v1845 = vpop.f32.mrf.mxu0
        %1846 = vdwg.mxu0
        %v1847 = vmax.f32 %v1841, 0.0
        %v1848 = vmax.f32 %v1844, 0.0
        %v1849 = vpack.c.bf16 %v1848, %v1847
        %v1850 = vld [vmem:[%s609] sm:$0xf]
        %v1851 = vld [vmem:[%s609 + $0x4] sm:$0xf]
        %v1852 = vld [vmem:[%s609 + $0x8] sm:$0xf]
        %v1853 = vld [vmem:[%s609 + $0xc] sm:$0xf]
        %v1854 = vld [vmem:[%s609 + $0x10] sm:$0xf]
        %v1855 = vld [vmem:[%s609 + $0x14] sm:$0xf]
        %v1856 = vld [vmem:[%s609 + $0x18] sm:$0xf]
        %v1857 = vld [vmem:[%s609 + $0x1c] sm:$0xf]
        %v1858 = vlaneseq
        %v1859 = vshrl.u32 %v1858, 7
        %v1860 = vsub.s32 1, %v1859
        %v1861 = vrot.slane %v689, %v1860
        %v1870 = vunpack.c.l.b16 %v1850
        %v1871 = vunpack.c.l.b16 %v1851
        %v1872 = vunpack.c.l.b16 %v1852
        %v1873 = vunpack.c.l.b16 %v1853
        %v1874 = vunpack.c.l.b16 %v1854
        %v1875 = vunpack.c.l.b16 %v1855
        %v1876 = vunpack.c.l.b16 %v1856
        %v1877 = vunpack.c.l.b16 %v1857
        %v1878 = vpack.c.b16 %v1871, %v1870
        %v1879 = vpack.c.b16 %v1873, %v1872
        %v1880 = vpack.c.b16 %v1875, %v1874
        %v1881 = vpack.c.b16 %v1877, %v1876
        %vm1886 = vcmask 523264
        %v1888 = vsel %vm1886, %v1849, 0
        %1890 = vmatprep.subr.bf16.mxu0 0
        %1891 = vmatpush1.bf16.msra.mxu0 0
        %1892 = vmatprep.subr.bf16.mxu0 0
        %1893 = vmatpush1.bf16.msra.mxu0 0
        %1894 = vmatprep.subr.bf16.mxu0 0
        %1895 = vmatpush1.bf16.msra.mxu0 0
        %1896 = vmatprep.subr.bf16.mxu0 0
        %1897 = vmatpush1.bf16.msra.mxu0 0
        %1898 = vmatprep.subr.bf16.mxu0 0
        %1899 = vmatpush1.bf16.msra.mxu0 %v1881
        %1900 = vmatprep.subr.bf16.mxu0 0
        %1901 = vmatpush1.bf16.msra.mxu0 %v1880
        %1902 = vmatprep.subr.bf16.mxu0 0
        %1903 = vmatpush1.bf16.msra.mxu0 %v1879
        %1904 = vmatprep.subr.bf16.mxu0 0
        %1905 = vmatpush1.bf16.msra.mxu0 %v1878
        %1906 = vmatprep.subr.bf16.mxu0 0
        %1907 = vmatpush2.bf16.msra.mxu0 0
        %1908 = vmatprep.subr.bf16.mxu0 0
        %1909 = vmatpush2.bf16.msra.mxu0 0
        %1910 = vmatprep.subr.bf16.mxu0 0
        %1911 = vmatpush2.bf16.msra.mxu0 0
        %1912 = vmatprep.subr.bf16.mxu0 0
        %1913 = vmatpush2.bf16.msra.mxu0 0
        %1914 = vmatprep.subr.bf16.mxu0 0
        %1915 = vmatpush2.bf16.msra.mxu0 0
        %1916 = vmatprep.subr.bf16.mxu0 0
        %1917 = vmatpush2.bf16.msra.mxu0 0
        %1918 = vmatprep.subr.bf16.mxu0 0
        %1919 = vmatpush2.bf16.msra.mxu0 0
        %1920 = vmatprep.subr.bf16.mxu0 0
        %1921 = vmatpush2.bf16.msra.mxu0 0
        %1922 = vmatprep.mubr.bf16.mxu0 0
        %1923 = vmatmul.mubr.bf16.gmra.mxu0 %v1888
        %v1924 = vpop.f32.mrf.mxu0
        %v1925 = vadd.f32 %v1861, %v1924
        %v1926 = vpop.f32.mrf.mxu0
        %v1927 = vpop.f32.mrf.mxu0
        %v1928 = vadd.f32 %v1861, %v1927
        %v1929 = vpop.f32.mrf.mxu0
        %1930 = vdwg.mxu0
        %v1931 = vadd.f32 %v1777, %v1925
        %v1932 = vadd.f32 %v1778, %v1928
        %v1933 = vsel %vm714, %v1931, 0.0
        %1934 = vadd.xlane.f32.xlu0 %v1933
        %v1935 = vpop.xlane.xlu0 %1934
        %v1936 = vsel %vm714, %v1932, 0.0
        %1937 = vadd.xlane.f32.xlu0 %v1936
        %v1938 = vpop.xlane.xlu0 %1937
        %v1939 = vmul.f32 %v1935, %v1746
        %v1940 = vmul.f32 %v1938, %v1746
        %v1941 = vsub.f32 %v1931, %v1939
        %v1942 = vsub.f32 %v1932, %v1940
        %v1943 = vmul.f32 %v1941, %v1941
        %v1944 = vmul.f32 %v1942, %v1942
        %v1945 = vsel %vm714, %v1943, 0.0
        %1946 = vadd.xlane.f32.xlu0 %v1945
        %v1947 = vpop.xlane.xlu0 %1946
        %v1948 = vsel %vm714, %v1944, 0.0
        %1949 = vadd.xlane.f32.xlu0 %v1948
        %v1950 = vpop.xlane.xlu0 %1949
        %v1951 = vmul.f32 %v1947, %v1746
        %v1952 = vmul.f32 %v1950, %v1746
        %v1953 = vadd.f32 %v1951, 1e-05
        %v1954 = vadd.f32 %v1952, 1e-05
        %v1955 = vrsqrt.pop %v1953
        %v1956 = vrsqrt.pop %v1954
        %v1957 = vmul.f32 %v1941, %v1955
        %v1958 = vmul.f32 %v1942, %v1956
        %v1959 = vlaneseq
        %v1960 = vshrl.u32 %v1959, 7
        %v1961 = vsub.s32 4, %v1960
        %v1962 = vrot.slane %v689, %v1961
        %v1963 = vmul.f32 %v1957, %v1962
        %v1964 = vmul.f32 %v1958, %v1962
        %v1965 = vlaneseq
        %v1966 = vshrl.u32 %v1965, 7
        %v1967 = vsub.s32 5, %v1966
        %v1968 = vrot.slane %v689, %v1967
        %v1969 = vadd.f32 %v1963, %v1968
        %v1970 = vadd.f32 %v1964, %v1968
        %1971 = vst.msk [vmem:[#allocation2] sm:$0xff] %vm714, %v1969
        %1972 = vst.msk [vmem:[#allocation2 + $0x8] sm:$0xff] %vm714, %v1970
        %p1973 = scmp.eq.s32.totalorder %s32, 1
        // Predicated region
        $region89: #{tpu_custom_call.1} parent=71 // pred_check
          %p1974 = pneg %p1973
        $region90: #{tpu_custom_call.1} parent=71 // pred_check_branch
          %1976 = sbr.rel (%p1974) target = $region92
        $region91: #{tpu_custom_call.1} parent=71 // pred_region
          %v1977 = vpack.c.bf16 %v1970, %v1969
          %v1978 = vld [vmem:[%s11] sm:$0xf]
          %v1979 = vld [vmem:[%s11 + $0x4] sm:$0xf]
          %v1980 = vld [vmem:[%s11 + $0x8] sm:$0xf]
          %v1981 = vld [vmem:[%s11 + $0xc] sm:$0xf]
          %v1982 = vld [vmem:[%s12] sm:$0x1]
          %v1984 = vlaneseq
          %v1985 = vshrl.u32 %v1984, 7
          %v1986 = vsub.s32 0, %v1985
          %v1987 = vrot.slane %v1982, %v1986
          %v1993 = vunpack.c.l.b16 %v1978
          %v1994 = vunpack.c.l.b16 %v1979
          %v1995 = vunpack.c.l.b16 %v1980
          %v1996 = vunpack.c.l.b16 %v1981
          %v1997 = vpack.c.b16 %v1994, %v1993
          %v1998 = vpack.c.b16 %v1996, %v1995
          %v2002 = vsel %vm714, %v1977, 0
          %2004 = vmatprep.subr.bf16.mxu0 0
          %2005 = vmatpush1.bf16.msra.mxu0 0
          %2006 = vmatprep.subr.bf16.mxu0 0
          %2007 = vmatpush1.bf16.msra.mxu0 0
          %2008 = vmatprep.subr.bf16.mxu0 0
          %2009 = vmatpush1.bf16.msra.mxu0 0
          %2010 = vmatprep.subr.bf16.mxu0 0
          %2011 = vmatpush1.bf16.msra.mxu0 0
          %2012 = vmatprep.subr.bf16.mxu0 0
          %2013 = vmatpush1.bf16.msra.mxu0 0
          %2014 = vmatprep.subr.bf16.mxu0 0
          %2015 = vmatpush1.bf16.msra.mxu0 0
          %2016 = vmatprep.subr.bf16.mxu0 0
          %2017 = vmatpush1.bf16.msra.mxu0 %v1998
          %2018 = vmatprep.subr.bf16.mxu0 0
          %2019 = vmatpush1.bf16.msra.mxu0 %v1997
          %2020 = vmatprep.subr.bf16.mxu0 0
          %2021 = vmatpush2.bf16.msra.mxu0 0
          %2022 = vmatprep.subr.bf16.mxu0 0
          %2023 = vmatpush2.bf16.msra.mxu0 0
          %2024 = vmatprep.subr.bf16.mxu0 0
          %2025 = vmatpush2.bf16.msra.mxu0 0
          %2026 = vmatprep.subr.bf16.mxu0 0
          %2027 = vmatpush2.bf16.msra.mxu0 0
          %2028 = vmatprep.subr.bf16.mxu0 0
          %2029 = vmatpush2.bf16.msra.mxu0 0
          %2030 = vmatprep.subr.bf16.mxu0 0
          %2031 = vmatpush2.bf16.msra.mxu0 0
          %2032 = vmatprep.subr.bf16.mxu0 0
          %2033 = vmatpush2.bf16.msra.mxu0 0
          %2034 = vmatprep.subr.bf16.mxu0 0
          %2035 = vmatpush2.bf16.msra.mxu0 0
          %2036 = vmatprep.mubr.bf16.mxu0 0
          %2037 = vmatmul.mubr.bf16.gmra.mxu0 %v2002
          %v2038 = vpop.f32.mrf.mxu0
          %v2039 = vadd.f32 %v1987, %v2038
          %v2040 = vpop.f32.mrf.mxu0
          %v2041 = vpop.f32.mrf.mxu0
          %v2042 = vadd.f32 %v1987, %v2041
          %v2043 = vpop.f32.mrf.mxu0
          %2044 = vdwg.mxu0
          %2045 = vst [vmem:[#allocation9] sm:$0xff] %v2039
          %2046 = vst [vmem:[#allocation9 + $0x8] sm:$0xff] %v2042
        $region92: #{tpu_custom_call.1} parent=71 // pred_fallthru
          _
        // Predicated region
        $region93: #{tpu_custom_call.1} parent=71 // pred_check
          %p2047 = pneg %p370
        $region94: #{tpu_custom_call.1} parent=71 // pred_check_branch
          %2049 = sbr.rel (%p2047) target = $region96
        $region95: #{tpu_custom_call.1} parent=71 // pred_region
          %s2050 = smul.u32 2, %s31
          %s2052 = ssub.s32 256, 256
          %2053 = vsyncadd [#allocation5], %s2052
          %s2054 = smul.addr %s2050, 128
          %s2055 = scalar_lea.hbm %s13, %s2054
          %s2056 = sshll.u32 [#allocation9], 4
          %s2057 = int_to_ptr.vmem [resolvable:$true] %s2056
          %2062 = dma.vmem_to_hbm [thread:$0]  %s2057, 256, %s2055, [#allocation5], 128, 128, 8
        $region96: #{tpu_custom_call.1} parent=71 // pred_fallthru
          _
        // Predicated region
        $region97: #{tpu_custom_call.1} parent=71 // pred_check
          %p2063 = pneg %p370
        $region98: #{tpu_custom_call.1} parent=71 // pred_check_branch
          %2065 = sbr.rel (%p2063) target = $region100
        $region99: #{tpu_custom_call.1} parent=71 // pred_region
          %2066 = dma.done [#allocation5], 256
        $region100: #{tpu_custom_call.1} parent=71 // pred_fallthru
          _
      $region72: #{tpu_custom_call.1} parent=5 // pred_fallthru
        _
      %p2067 = scmp.le.s32.totalorder 2, %s22
      // Predicated region
      $region101: #{tpu_custom_call.1} parent=5 // pred_check
        %p2068 = pneg %p2067
      $region102: #{tpu_custom_call.1} parent=5 // pred_check_branch
        %2070 = sbr.rel (%p2068) target = $region104
      $region103: #{tpu_custom_call.1} parent=5 // pred_region
        %s2071 = ssub.s32 %s22, 2
      $region104: #{tpu_custom_call.1} parent=5 // pred_fallthru
        _
    $region6: #{tpu_custom_call.1} parent=1 // loop_footer
      %s26 = sadd.s32 1, %s22
    $region7: #{tpu_custom_call.1} parent=1 // loop_footer_branch
      %21 = sbr.rel target = $region3
    $region8: #{tpu_custom_call.1} parent=1 // loop_exit
      _
    %2072 = vsyncpa [#allocation4], 1
    %s2073 = scalar_lea.sflag [#allocation4], 1
    %2074 = vsyncpa %s2073, 1
    %2075 = vsyncpa [#allocation7], 1
    %2076 = vsyncpa [#allocation5], 1
    %s2077 = scalar_lea.sflag [#allocation5], 1
    %2078 = vsyncpa %s2077, 1

</llo_original>
